<compile_context>
chip_gen: v6e
topology: v6e:2x2x1
jax: 0.10.0
libtpu: 0.0.40
codegen_flags: <defaults>
</compile_context>

<pallas_src>
import functools

import jax
import jax.numpy as jnp
from jax.experimental import pallas as pl
from jax.experimental.pallas import tpu as pltpu

OUT_PAD = 128   # lane-dense output width; real predictions live in the first T cols


# ----------------------------------------------------------------------------
# Fused head kernel
# ----------------------------------------------------------------------------
def _fused_head_kernel(
    lig_ref, prot_ref, org_ref, cond_ref,                 # activations
    lig_w, lig_b, cond_w, cond_b, p2l_w, p2l_b,            # encoder-tail linears
    eg_w1, eg_b1, e_w2, e_b2, e_w3, e_b3,                  # experts (+gates merged into layer 1)
    gex_w,                                                 # gate -> expert-lane broadcast (0/1)
    t_w1, t_b1, t_w2, t_b2, t_w3, t_b3,                    # towers (block-diag, CGC-sum folded)
    o_ref,                                                 # (B, OUT_PAD) lane-dense output
    *, num_tasks, num_experts, expert_out, expert_hidden, lig_dim):
    f32, bf16 = jnp.float32, jnp.bfloat16
    T, E, Do, H = num_tasks, num_experts, expert_out, expert_hidden
    A = T * E + E                                          # unique experts (task + shared)

    def mm(x_bf16, w_ref):                                 # bf16 MXU matmul, f32 accumulate
        return jnp.dot(x_bf16, w_ref[...], preferred_element_type=f32)

    # --- encoder tail (synthetic encoder projections + self.pro2lig) ---
    h_lig = jnp.maximum(mm(lig_ref[...].astype(bf16), lig_w) + lig_b[...], 0.0)
    h_prot = mm(prot_ref[...].astype(bf16), p2l_w) + p2l_b[...]
    cond = cond_ref[...]                                   # (B, 2) f32
    # K=2 contraction stays on the VPU: two broadcast mul-adds, no MXU fill/drain.
    h_aux = (org_ref[...]
             + cond[:, 0:1] * cond_w[0:1, :]
             + cond[:, 1:2] * cond_w[1:2, :]
             + cond_b[...])

    # h = [h_lig | h_prot | h_aux], materialized once, single bf16 cast.
    h = jnp.concatenate([h_lig, h_prot, h_aux], axis=1).astype(bf16)   # (B, 3D)

    # --- expert layer 1 + ALL gate logits from ONE merged matmul ---
    s = mm(h, eg_w1) + eg_b1[...]                          # (B, A*H + T*2E)
    y1 = jnp.maximum(s[:, :A * H], 0.0).astype(bf16)       # (B, A*H)
    logits = s[:, A * H:A * H + T * 2 * E]                 # (B, T*2E), f32

    y2 = jnp.maximum(mm(y1, e_w2) + e_b2[...], 0.0).astype(bf16)        # block-diag
    y3 = mm(y2, e_w3) + e_b3[...]                          # (B, T*2E*Do), per-task contiguous

    # --- softmax gates (per task group; reciprocal on the EUP) ---
    gparts = []
    for t in range(T):
        lg = logits[:, t * 2 * E:(t + 1) * 2 * E]          # (B, 2E)
        m = jnp.max(lg, axis=-1, keepdims=True)
        ex = jnp.exp(lg - m)
        gparts.append(ex * pl.reciprocal(jnp.sum(ex, axis=-1, keepdims=True), approx=True))
    g = jnp.concatenate(gparts, axis=1).astype(bf16)       # (B, T*2E)

    # Broadcast each gate to its expert's Do lanes with one tiny 0/1 matmul
    # (no per-expert lane slicing, no VMEM scratch).
    g_broad = mm(g, gex_w)                                 # (B, T*2E*Do) f32
    ti = (y3 * g_broad).astype(bf16)                       # sum-over-experts folded into t_w1

    # --- towers: block-diagonal slabs, lane-dense padded final output ---
    z = jnp.maximum(mm(ti, t_w1) + t_b1[...], 0.0).astype(bf16)
    z = jnp.maximum(mm(z, t_w2) + t_b2[...], 0.0).astype(bf16)
    z = mm(z, t_w3) + t_b3[...]                            # (B, OUT_PAD)
    o_ref[...] = z.astype(o_ref.dtype)


_PACKED_KEYS = [
    "lig_w", "lig_b", "cond_w", "cond_b", "p2l_w", "p2l_b",
    "eg_w1", "eg_b1", "e_w2", "e_b2", "e_w3", "e_b3",
    "gex_w",
    "t_w1", "t_b1", "t_w2", "t_b2", "t_w3", "t_b3",
]


def fused_head(packed, lig_pool, h_prot, org_emb, condition, cfg):
    """Single pallas_call covering the whole MTL head. Returns (B, num_tasks)."""
    B = lig_pool.shape[0]
    T = cfg["num_tasks"]
    # Batch tile: 128-row tiles when B allows (pipelined, megacore-parallel);
    # otherwise one full-batch step (tiny demo batches).
    bt = 128 if (B % 128 == 0) else B
    grid = (B // bt,)

    acts = [lig_pool, h_prot, org_emb, condition]
    weights = [packed[k] for k in _PACKED_KEYS]

    def act_spec(a):
        return pl.BlockSpec((bt, a.shape[1]), lambda i: (i, 0))

    def w_spec(a):
        zeros = (0,) * a.ndim
        return pl.BlockSpec(a.shape, lambda i, z=zeros: z)   # resident across the grid

    kernel = functools.partial(
        _fused_head_kernel,
        num_tasks=T,
        num_experts=cfg["num_experts"],
        expert_out=cfg["expert_out"],
        expert_hidden=cfg["expert_hidden"],
        lig_dim=cfg["lig_dim"],
    )
    out = pl.pallas_call(
        kernel,
        out_shape=jax.ShapeDtypeStruct((B, OUT_PAD), jnp.float32),
        grid=grid,
        in_specs=[act_spec(a) for a in acts] + [w_spec(w) for w in weights],
        out_specs=pl.BlockSpec((bt, OUT_PAD), lambda i: (i, 0)),
        compiler_params=pltpu.CompilerParams(dimension_semantics=("parallel",)),
    )(*acts, *weights)
    return out[:, :T]


# ----------------------------------------------------------------------------
# Parameter init (deterministic, in-script) -- mirrors per-expert nn.Linear stacks
# ----------------------------------------------------------------------------
def init_linear(key, din, dout):
    kw, kb = jax.random.split(key)
    scale = 1.0 / (din ** 0.5)
    w = jax.random.uniform(kw, (din, dout), jnp.float32, -scale, scale)
    b = jax.random.uniform(kb, (dout,), jnp.float32, -scale, scale)
    return (w, b)


def init_mlp(key, in_size, hidden, out_size, n_hidden_layers):
    keys = jax.random.split(key, n_hidden_layers + 1)
    layers = [init_linear(keys[0], in_size, hidden)]
    for i in range(1, n_hidden_layers):
        layers.append(init_linear(keys[i], hidden, hidden))
    layers.append(init_linear(keys[-1], hidden, out_size))
    return layers


def init_params(key, cfg):
    keys = iter(jax.random.split(key, 64))
    p = {}
    # synthetic encoder params  (TODO(synk): stand-ins for MoleBERT / protein LM)
    p["lig_proj"] = init_linear(next(keys), cfg["node_feat"], cfg["lig_dim"])
    p["prot_embed"] = 0.1 * jax.random.normal(next(keys), (cfg["vocab"], cfg["prot_dim"]), jnp.float32)
    p["org_embed"] = 0.1 * jax.random.normal(next(keys), (cfg["n_org"], cfg["aux_dim"]), jnp.float32)
    p["cond_proj"] = init_linear(next(keys), 2, cfg["aux_dim"])
    # MTLModel head
    p["pro2lig"] = init_linear(next(keys), cfg["prot_dim"], cfg["lig_dim"])
    input_size = cfg["lig_dim"] * 3          # use_ph/use_temperature/use_organism = True
    E = cfg["num_experts"]
    p["shared_experts"] = [
        init_mlp(next(keys), input_size, cfg["expert_hidden"], cfg["expert_out"], cfg["expert_layers"])
        for _ in range(E)
    ]
    p["task_experts"] = [
        [init_mlp(next(keys), input_size, cfg["expert_hidden"], cfg["expert_out"], cfg["expert_layers"])
         for _ in range(E)]
        for _ in range(cfg["num_tasks"])
    ]
    p["gates"] = [init_linear(next(keys), input_size, 2 * E) for _ in range(cfg["num_tasks"])]
    p["towers"] = [
        init_mlp(next(keys), cfg["expert_out"], cfg["tower_hid_unit"], 1, cfg["tower_hid_layer"])
        for _ in range(cfg["num_tasks"])
    ]
    return p


def _block_diag(mats):
    rows = sum(m.shape[0] for m in mats)
    cols = sum(m.shape[1] for m in mats)
    out = jnp.zeros((rows, cols), mats[0].dtype)
    r = c = 0
    for m in mats:
        out = out.at[r:r + m.shape[0], c:c + m.shape[1]].set(m)
        r += m.shape[0]
        c += m.shape[1]
    return out


def pack_params(p, cfg):
    """Pack per-expert / per-task weights into lane-dense bf16 slabs (one-time)."""
    T, E = cfg["num_tasks"], cfg["num_experts"]
    H, Do, U = cfg["expert_hidden"], cfg["expert_out"], cfg["tower_hid_unit"]
    A = T * E + E

    def w_(x):
        return x.astype(jnp.bfloat16)

    def b_(x):
        return x.reshape(1, -1).astype(jnp.float32)

    packed = {}
    packed["lig_w"], packed["lig_b"] = w_(p["lig_proj"][0]), b_(p["lig_proj"][1])
    # condition projection stays f32 (used on the VPU path in-kernel)
    packed["cond_w"], packed["cond_b"] = p["cond_proj"][0].astype(jnp.float32), b_(p["cond_proj"][1])
    packed["p2l_w"], packed["p2l_b"] = w_(p["pro2lig"][0]), b_(p["pro2lig"][1])

    # Unique expert order: task0 experts, task1 experts, ..., shared experts (last).
    experts = [e for t in range(T) for e in p["task_experts"][t]] + p["shared_experts"]

    # Merged layer-1 slab: all experts' layer-1 weights + ALL gate weights appended
    # -> one matmul produces every expert hidden AND every gate's logits.
    gates_w = jnp.concatenate([g[0] for g in p["gates"]], axis=1)     # (3D, T*2E)
    gates_b = jnp.concatenate([g[1] for g in p["gates"]])
    packed["eg_w1"] = w_(jnp.concatenate([e[0][0] for e in experts] + [gates_w], axis=1))
    packed["eg_b1"] = b_(jnp.concatenate([e[0][1] for e in experts] + [gates_b]))

    packed["e_w2"] = w_(_block_diag([e[1][0] for e in experts]))      # (A*H, A*H)
    packed["e_b2"] = b_(jnp.concatenate([e[1][1] for e in experts]))

    # Layer-3: per-task column groups [task experts | shared experts]; shared-expert
    # blocks duplicated across tasks (columns only -- hidden compute stays unique).
    def unique_idx(t, j):
        return t * E + j if j < E else T * E + (j - E)

    w3 = jnp.zeros((A * H, T * 2 * E * Do), jnp.float32)
    b3 = jnp.zeros((T * 2 * E * Do,), jnp.float32)
    for t in range(T):
        for j in range(2 * E):
            u = unique_idx(t, j)
            col = (t * 2 * E + j) * Do
            w3 = w3.at[u * H:(u + 1) * H, col:col + Do].set(experts[u][2][0])
            b3 = b3.at[col:col + Do].set(experts[u][2][1])
    packed["e_w3"], packed["e_b3"] = w_(w3), b_(b3)

    # Gate -> expert-lane broadcast matrix (0/1), removes in-kernel lane slicing.
    gex = jnp.zeros((T * 2 * E, T * 2 * E * Do), jnp.float32)
    for q in range(T * 2 * E):
        gex = gex.at[q, q * Do:(q + 1) * Do].set(1.0)
    packed["gex_w"] = w_(gex)

    towers = p["towers"]
    # Tower layer-1 with the CGC expert-sum folded in: rows replicated once per
    # expert so (y3 * gate_broadcast) @ t_w1 == CGC_combine @ W1 (block-diag).
    w1 = jnp.zeros((T * 2 * E * Do, T * U), jnp.float32)
    for t in range(T):
        for j in range(2 * E):
            r = (t * 2 * E + j) * Do
            w1 = w1.at[r:r + Do, t * U:(t + 1) * U].set(towers[t][0][0])
    packed["t_w1"] = w_(w1)
    packed["t_b1"] = b_(jnp.concatenate([t[0][1] for t in towers]))
    packed["t_w2"] = w_(_block_diag([t[1][0] for t in towers]))
    packed["t_b2"] = b_(jnp.concatenate([t[1][1] for t in towers]))
    # Final tower layer padded to a lane-dense OUT_PAD-wide output slab.
    w3t = _block_diag([t[2][0] for t in towers])                      # (T*U, T)
    b3t = jnp.concatenate([t[2][1] for t in towers])                  # (T,)
    packed["t_w3"] = w_(jnp.zeros((T * U, OUT_PAD), jnp.float32).at[:, :T].set(w3t))
    packed["t_b3"] = b_(jnp.zeros((OUT_PAD,), jnp.float32).at[:T].set(b3t))
    return packed


# ----------------------------------------------------------------------------
# Forward pass (mirrors MTLModel.forward, gen_vec=False)
# ----------------------------------------------------------------------------
def build_forward(params, packed, cfg):
    @jax.jit
    def fwd(input_ids, attention_mask, mol_graph, organ_ids, condition):
        # --- ComplexEncoder stand-in: gathers + pools in XLA, projections fused ---
        # TODO(synk): real ligand GNN / protein LM replaced by synthetic encoders.
        lig_pool = jnp.mean(mol_graph, axis=1)                         # (B, node_feat)
        tok_emb = params["prot_embed"][input_ids]                      # (B, L, prot_dim)
        mask = attention_mask[..., None].astype(jnp.float32)
        h_prot = jnp.sum(tok_emb * mask, axis=1) / jnp.maximum(jnp.sum(mask, axis=1), 1.0)
        org_emb = params["org_embed"][organ_ids]                       # (B, aux_dim)
        # --- whole MTL head in one Pallas kernel ---
        return fused_head(packed, lig_pool, h_prot, org_emb, condition, cfg)  # (B, T)

    return fwd


# ----------------------------------------------------------------------------
if __name__ == "__main__":
    cfg = dict(
        B=2, seq_len=8, vocab=32, n_org=8, node_feat=16, n_nodes=6,
        lig_dim=32, prot_dim=48, aux_dim=32,
        expert_out=16, expert_hidden=32, expert_layers=2,
        num_experts=2, num_tasks=2, tower_hid_layer=2, tower_hid_unit=32,
    )
    key = jax.random.PRNGKey(0)
    kp, k1, k2, k3, k4 = jax.random.split(key, 5)
    params = init_params(kp, cfg)
    packed = pack_params(params, cfg)
    fwd = build_forward(params, packed, cfg)

    input_ids = jax.random.randint(k1, (cfg["B"], cfg["seq_len"]), 0, cfg["vocab"])
    attention_mask = jnp.ones((cfg["B"], cfg["seq_len"]), jnp.int32)
    mol_graph = jax.random.normal(k2, (cfg["B"], cfg["n_nodes"], cfg["node_feat"]), jnp.float32)
    organ_ids = jax.random.randint(k3, (cfg["B"],), 0, cfg["n_org"])
    condition = jax.random.uniform(k4, (cfg["B"], 2), jnp.float32)     # (pH, temperature)
    task_names = ["kcat", "km"]

    out_mat = fwd(input_ids, attention_mask, mol_graph, organ_ids, condition)
    jax.block_until_ready(out_mat)

    out = {name: out_mat[:, t:t + 1] for t, name in enumerate(task_names)}
    assert set(out.keys()) == set(task_names)
    assert all(v.shape == (cfg["B"], 1) for v in out.values())
    assert all(bool(jnp.all(jnp.isfinite(v))) for v in out.values())
    print("KERNEL_OK")
</pallas_src>

<mosaic_0001>
module attributes {stable_mosaic.version = 11 : i64} {
  func.func @_fused_head_kernel(%arg0: i32, %arg1: memref<2x16xf32, #tpu.memory_space<vmem>>, %arg2: memref<2x48xf32, #tpu.memory_space<vmem>>, %arg3: memref<2x32xf32, #tpu.memory_space<vmem>>, %arg4: memref<2x2xf32, #tpu.memory_space<vmem>>, %arg5: memref<16x32xbf16, #tpu.memory_space<vmem>>, %arg6: memref<1x32xf32, #tpu.memory_space<vmem>>, %arg7: memref<2x32xf32, #tpu.memory_space<vmem>>, %arg8: memref<1x32xf32, #tpu.memory_space<vmem>>, %arg9: memref<48x32xbf16, #tpu.memory_space<vmem>>, %arg10: memref<1x32xf32, #tpu.memory_space<vmem>>, %arg11: memref<96x200xbf16, #tpu.memory_space<vmem>>, %arg12: memref<1x200xf32, #tpu.memory_space<vmem>>, %arg13: memref<192x192xbf16, #tpu.memory_space<vmem>>, %arg14: memref<1x192xf32, #tpu.memory_space<vmem>>, %arg15: memref<192x128xbf16, #tpu.memory_space<vmem>>, %arg16: memref<1x128xf32, #tpu.memory_space<vmem>>, %arg17: memref<8x128xbf16, #tpu.memory_space<vmem>>, %arg18: memref<128x64xbf16, #tpu.memory_space<vmem>>, %arg19: memref<1x64xf32, #tpu.memory_space<vmem>>, %arg20: memref<64x64xbf16, #tpu.memory_space<vmem>>, %arg21: memref<1x64xf32, #tpu.memory_space<vmem>>, %arg22: memref<64x128xbf16, #tpu.memory_space<vmem>>, %arg23: memref<1x128xf32, #tpu.memory_space<vmem>>, %arg24: memref<2x128xf32, #tpu.memory_space<vmem>>) attributes {dimension_semantics = [#tpu.dimension_semantics<parallel>], iteration_bounds = array<i64: 1>, scalar_prefetch = 0 : i64, scratch_operands = 0 : i64, tpu.core_type = #tpu.core_type<tc>, window_params = [{transform_indices = @transform_0, window_bounds = array<i64: 2, 16>}, {transform_indices = @transform_1, window_bounds = array<i64: 2, 48>}, {transform_indices = @transform_2, window_bounds = array<i64: 2, 32>}, {transform_indices = @transform_3, window_bounds = array<i64: 2, 2>}, {pipeline_mode = #tpu.pipeline_mode<synchronous>, transform_indices = @transform_4, window_bounds = array<i64: 16, 32>}, {pipeline_mode = #tpu.pipeline_mode<synchronous>, transform_indices = @transform_5, window_bounds = array<i64: 1, 32>}, {pipeline_mode = #tpu.pipeline_mode<synchronous>, transform_indices = @transform_6, window_bounds = array<i64: 2, 32>}, {pipeline_mode = #tpu.pipeline_mode<synchronous>, transform_indices = @transform_7, window_bounds = array<i64: 1, 32>}, {pipeline_mode = #tpu.pipeline_mode<synchronous>, transform_indices = @transform_8, window_bounds = array<i64: 48, 32>}, {pipeline_mode = #tpu.pipeline_mode<synchronous>, transform_indices = @transform_9, window_bounds = array<i64: 1, 32>}, {pipeline_mode = #tpu.pipeline_mode<synchronous>, transform_indices = @transform_10, window_bounds = array<i64: 96, 200>}, {pipeline_mode = #tpu.pipeline_mode<synchronous>, transform_indices = @transform_11, window_bounds = array<i64: 1, 200>}, {pipeline_mode = #tpu.pipeline_mode<synchronous>, transform_indices = @transform_12, window_bounds = array<i64: 192, 192>}, {pipeline_mode = #tpu.pipeline_mode<synchronous>, transform_indices = @transform_13, window_bounds = array<i64: 1, 192>}, {pipeline_mode = #tpu.pipeline_mode<synchronous>, transform_indices = @transform_14, window_bounds = array<i64: 192, 128>}, {pipeline_mode = #tpu.pipeline_mode<synchronous>, transform_indices = @transform_15, window_bounds = array<i64: 1, 128>}, {pipeline_mode = #tpu.pipeline_mode<synchronous>, transform_indices = @transform_16, window_bounds = array<i64: 8, 128>}, {pipeline_mode = #tpu.pipeline_mode<synchronous>, transform_indices = @transform_17, window_bounds = array<i64: 128, 64>}, {pipeline_mode = #tpu.pipeline_mode<synchronous>, transform_indices = @transform_18, window_bounds = array<i64: 1, 64>}, {pipeline_mode = #tpu.pipeline_mode<synchronous>, transform_indices = @transform_19, window_bounds = array<i64: 64, 64>}, {pipeline_mode = #tpu.pipeline_mode<synchronous>, transform_indices = @transform_20, window_bounds = array<i64: 1, 64>}, {pipeline_mode = #tpu.pipeline_mode<synchronous>, transform_indices = @transform_21, window_bounds = array<i64: 64, 128>}, {pipeline_mode = #tpu.pipeline_mode<synchronous>, transform_indices = @transform_22, window_bounds = array<i64: 1, 128>}, {transform_indices = @transform_23, window_bounds = array<i64: 2, 128>}]} {
    %c0 = arith.constant 0 : index
    %c0_0 = arith.constant 0 : index
    %0 = vector.load %arg1[%c0, %c0_0] : memref<2x16xf32, #tpu.memory_space<vmem>>, vector<2x16xf32>
    %1 = arith.truncf %0 : vector<2x16xf32> to vector<2x16xbf16>
    %c0_1 = arith.constant 0 : index
    %c0_2 = arith.constant 0 : index
    %2 = vector.load %arg5[%c0_1, %c0_2] : memref<16x32xbf16, #tpu.memory_space<vmem>>, vector<16x32xbf16>
    %cst = arith.constant dense<0.000000e+00> : vector<2x32xf32>
    %3 = tpu.matmul %1, %2, %cst {dimension_numbers = #tpu.dot_dimension_numbers<[1], [0], [0], [1], [0, 0, 1, 1], [], []>} : vector<2x16xbf16>, vector<16x32xbf16>, vector<2x32xf32> -> vector<2x32xf32>
    %c0_3 = arith.constant 0 : index
    %c0_4 = arith.constant 0 : index
    %4 = vector.load %arg6[%c0_3, %c0_4] : memref<1x32xf32, #tpu.memory_space<vmem>>, vector<1x32xf32>
    %5 = vector.broadcast %4 : vector<1x32xf32> to vector<2x32xf32>
    %6 = arith.addf %3, %5 : vector<2x32xf32>
    %cst_5 = arith.constant 0.000000e+00 : f32
    %7 = vector.broadcast %cst_5 : f32 to vector<2x32xf32>
    %8 = arith.maximumf %6, %7 : vector<2x32xf32>
    %c0_6 = arith.constant 0 : index
    %c0_7 = arith.constant 0 : index
    %9 = vector.load %arg2[%c0_6, %c0_7] : memref<2x48xf32, #tpu.memory_space<vmem>>, vector<2x48xf32>
    %10 = arith.truncf %9 : vector<2x48xf32> to vector<2x48xbf16>
    %c0_8 = arith.constant 0 : index
    %c0_9 = arith.constant 0 : index
    %11 = vector.load %arg9[%c0_8, %c0_9] : memref<48x32xbf16, #tpu.memory_space<vmem>>, vector<48x32xbf16>
    %cst_10 = arith.constant dense<0.000000e+00> : vector<2x32xf32>
    %12 = tpu.matmul %10, %11, %cst_10 {dimension_numbers = #tpu.dot_dimension_numbers<[1], [0], [0], [1], [0, 0, 1, 1], [], []>} : vector<2x48xbf16>, vector<48x32xbf16>, vector<2x32xf32> -> vector<2x32xf32>
    %c0_11 = arith.constant 0 : index
    %c0_12 = arith.constant 0 : index
    %13 = vector.load %arg10[%c0_11, %c0_12] : memref<1x32xf32, #tpu.memory_space<vmem>>, vector<1x32xf32>
    %14 = vector.broadcast %13 : vector<1x32xf32> to vector<2x32xf32>
    %15 = arith.addf %12, %14 : vector<2x32xf32>
    %c0_13 = arith.constant 0 : index
    %c0_14 = arith.constant 0 : index
    %16 = vector.load %arg4[%c0_13, %c0_14] : memref<2x2xf32, #tpu.memory_space<vmem>>, vector<2x2xf32>
    %c0_15 = arith.constant 0 : index
    %c0_16 = arith.constant 0 : index
    %17 = vector.load %arg3[%c0_15, %c0_16] : memref<2x32xf32, #tpu.memory_space<vmem>>, vector<2x32xf32>
    %18 = vector.extract_strided_slice %16 {offsets = [0, 0], sizes = [2, 1], strides = [1, 1]} : vector<2x2xf32> to vector<2x1xf32>
    %c0_17 = arith.constant 0 : index
    %c0_18 = arith.constant 0 : index
    %19 = vector.load %arg7[%c0_17, %c0_18] : memref<2x32xf32, #tpu.memory_space<vmem>>, vector<1x32xf32>
    %20 = vector.broadcast %18 : vector<2x1xf32> to vector<2x32xf32>
    %21 = vector.broadcast %19 : vector<1x32xf32> to vector<2x32xf32>
    %22 = arith.mulf %20, %21 : vector<2x32xf32>
    %23 = arith.addf %17, %22 : vector<2x32xf32>
    %24 = vector.extract_strided_slice %16 {offsets = [0, 1], sizes = [2, 1], strides = [1, 1]} : vector<2x2xf32> to vector<2x1xf32>
    %c1 = arith.constant 1 : index
    %c0_19 = arith.constant 0 : index
    %25 = vector.load %arg7[%c1, %c0_19] : memref<2x32xf32, #tpu.memory_space<vmem>>, vector<1x32xf32>
    %26 = vector.broadcast %24 : vector<2x1xf32> to vector<2x32xf32>
    %27 = vector.broadcast %25 : vector<1x32xf32> to vector<2x32xf32>
    %28 = arith.mulf %26, %27 : vector<2x32xf32>
    %29 = arith.addf %23, %28 : vector<2x32xf32>
    %c0_20 = arith.constant 0 : index
    %c0_21 = arith.constant 0 : index
    %30 = vector.load %arg8[%c0_20, %c0_21] : memref<1x32xf32, #tpu.memory_space<vmem>>, vector<1x32xf32>
    %31 = vector.broadcast %30 : vector<1x32xf32> to vector<2x32xf32>
    %32 = arith.addf %29, %31 : vector<2x32xf32>
    %33 = tpu.concatenate %8, %15, %32 in 1 : vector<2x32xf32>, vector<2x32xf32>, vector<2x32xf32> -> vector<2x96xf32>
    %34 = arith.truncf %33 : vector<2x96xf32> to vector<2x96xbf16>
    %c0_22 = arith.constant 0 : index
    %c0_23 = arith.constant 0 : index
    %35 = vector.load %arg11[%c0_22, %c0_23] : memref<96x200xbf16, #tpu.memory_space<vmem>>, vector<96x200xbf16>
    %cst_24 = arith.constant dense<0.000000e+00> : vector<2x200xf32>
    %36 = tpu.matmul %34, %35, %cst_24 {dimension_numbers = #tpu.dot_dimension_numbers<[1], [0], [0], [1], [0, 0, 1, 1], [], []>} : vector<2x96xbf16>, vector<96x200xbf16>, vector<2x200xf32> -> vector<2x200xf32>
    %c0_25 = arith.constant 0 : index
    %c0_26 = arith.constant 0 : index
    %37 = vector.load %arg12[%c0_25, %c0_26] : memref<1x200xf32, #tpu.memory_space<vmem>>, vector<1x200xf32>
    %38 = vector.broadcast %37 : vector<1x200xf32> to vector<2x200xf32>
    %39 = arith.addf %36, %38 : vector<2x200xf32>
    %40 = vector.extract_strided_slice %39 {offsets = [0, 0], sizes = [2, 192], strides = [1, 1]} : vector<2x200xf32> to vector<2x192xf32>
    %cst_27 = arith.constant 0.000000e+00 : f32
    %41 = vector.broadcast %cst_27 : f32 to vector<2x192xf32>
    %42 = arith.maximumf %40, %41 : vector<2x192xf32>
    %43 = arith.truncf %42 : vector<2x192xf32> to vector<2x192xbf16>
    %44 = vector.extract_strided_slice %39 {offsets = [0, 192], sizes = [2, 8], strides = [1, 1]} : vector<2x200xf32> to vector<2x8xf32>
    %c0_28 = arith.constant 0 : index
    %c0_29 = arith.constant 0 : index
    %45 = vector.load %arg13[%c0_28, %c0_29] : memref<192x192xbf16, #tpu.memory_space<vmem>>, vector<192x192xbf16>
    %cst_30 = arith.constant dense<0.000000e+00> : vector<2x192xf32>
    %46 = tpu.matmul %43, %45, %cst_30 {dimension_numbers = #tpu.dot_dimension_numbers<[1], [0], [0], [1], [0, 0, 1, 1], [], []>} : vector<2x192xbf16>, vector<192x192xbf16>, vector<2x192xf32> -> vector<2x192xf32>
    %c0_31 = arith.constant 0 : index
    %c0_32 = arith.constant 0 : index
    %47 = vector.load %arg14[%c0_31, %c0_32] : memref<1x192xf32, #tpu.memory_space<vmem>>, vector<1x192xf32>
    %48 = vector.broadcast %47 : vector<1x192xf32> to vector<2x192xf32>
    %49 = arith.addf %46, %48 : vector<2x192xf32>
    %cst_33 = arith.constant 0.000000e+00 : f32
    %50 = vector.broadcast %cst_33 : f32 to vector<2x192xf32>
    %51 = arith.maximumf %49, %50 : vector<2x192xf32>
    %52 = arith.truncf %51 : vector<2x192xf32> to vector<2x192xbf16>
    %c0_34 = arith.constant 0 : index
    %c0_35 = arith.constant 0 : index
    %53 = vector.load %arg15[%c0_34, %c0_35] : memref<192x128xbf16, #tpu.memory_space<vmem>>, vector<192x128xbf16>
    %cst_36 = arith.constant dense<0.000000e+00> : vector<2x128xf32>
    %54 = tpu.matmul %52, %53, %cst_36 {dimension_numbers = #tpu.dot_dimension_numbers<[1], [0], [0], [1], [0, 0, 1, 1], [], []>} : vector<2x192xbf16>, vector<192x128xbf16>, vector<2x128xf32> -> vector<2x128xf32>
    %c0_37 = arith.constant 0 : index
    %c0_38 = arith.constant 0 : index
    %55 = vector.load %arg16[%c0_37, %c0_38] : memref<1x128xf32, #tpu.memory_space<vmem>>, vector<1x128xf32>
    %56 = vector.broadcast %55 : vector<1x128xf32> to vector<2x128xf32>
    %57 = arith.addf %54, %56 : vector<2x128xf32>
    %58 = vector.extract_strided_slice %44 {offsets = [0, 0], sizes = [2, 4], strides = [1, 1]} : vector<2x8xf32> to vector<2x4xf32>
    %cst_39 = arith.constant dense<0xFF800000> : vector<2xf32>
    %59 = vector.multi_reduction <maximumf>, %58, %cst_39 [1] : vector<2x4xf32> to vector<2xf32>
    %60 = vector.shape_cast %59 : vector<2xf32> to vector<2x1xf32>
    %61 = vector.broadcast %60 : vector<2x1xf32> to vector<2x4xf32>
    %62 = arith.subf %58, %61 : vector<2x4xf32>
    %63 = math.exp %62 : vector<2x4xf32>
    %cst_40 = arith.constant dense<0.000000e+00> : vector<2xf32>
    %64 = vector.multi_reduction <add>, %63, %cst_40 [1] : vector<2x4xf32> to vector<2xf32>
    %65 = vector.shape_cast %64 : vector<2xf32> to vector<2x1xf32>
    %66 = tpu.reciprocal %65 {approx = true} : vector<2x1xf32> -> vector<2x1xf32>
    %67 = vector.broadcast %66 : vector<2x1xf32> to vector<2x4xf32>
    %68 = arith.mulf %63, %67 : vector<2x4xf32>
    %69 = vector.extract_strided_slice %44 {offsets = [0, 4], sizes = [2, 4], strides = [1, 1]} : vector<2x8xf32> to vector<2x4xf32>
    %cst_41 = arith.constant dense<0xFF800000> : vector<2xf32>
    %70 = vector.multi_reduction <maximumf>, %69, %cst_41 [1] : vector<2x4xf32> to vector<2xf32>
    %71 = vector.shape_cast %70 : vector<2xf32> to vector<2x1xf32>
    %72 = vector.broadcast %71 : vector<2x1xf32> to vector<2x4xf32>
    %73 = arith.subf %69, %72 : vector<2x4xf32>
    %74 = math.exp %73 : vector<2x4xf32>
    %cst_42 = arith.constant dense<0.000000e+00> : vector<2xf32>
    %75 = vector.multi_reduction <add>, %74, %cst_42 [1] : vector<2x4xf32> to vector<2xf32>
    %76 = vector.shape_cast %75 : vector<2xf32> to vector<2x1xf32>
    %77 = tpu.reciprocal %76 {approx = true} : vector<2x1xf32> -> vector<2x1xf32>
    %78 = vector.broadcast %77 : vector<2x1xf32> to vector<2x4xf32>
    %79 = arith.mulf %74, %78 : vector<2x4xf32>
    %80 = tpu.concatenate %68, %79 in 1 : vector<2x4xf32>, vector<2x4xf32> -> vector<2x8xf32>
    %81 = arith.truncf %80 : vector<2x8xf32> to vector<2x8xbf16>
    %c0_43 = arith.constant 0 : index
    %c0_44 = arith.constant 0 : index
    %82 = vector.load %arg17[%c0_43, %c0_44] : memref<8x128xbf16, #tpu.memory_space<vmem>>, vector<8x128xbf16>
    %cst_45 = arith.constant dense<0.000000e+00> : vector<2x128xf32>
    %83 = tpu.matmul %81, %82, %cst_45 {dimension_numbers = #tpu.dot_dimension_numbers<[1], [0], [0], [1], [0, 0, 1, 1], [], []>} : vector<2x8xbf16>, vector<8x128xbf16>, vector<2x128xf32> -> vector<2x128xf32>
    %84 = arith.mulf %57, %83 : vector<2x128xf32>
    %85 = arith.truncf %84 : vector<2x128xf32> to vector<2x128xbf16>
    %c0_46 = arith.constant 0 : index
    %c0_47 = arith.constant 0 : index
    %86 = vector.load %arg18[%c0_46, %c0_47] : memref<128x64xbf16, #tpu.memory_space<vmem>>, vector<128x64xbf16>
    %cst_48 = arith.constant dense<0.000000e+00> : vector<2x64xf32>
    %87 = tpu.matmul %85, %86, %cst_48 {dimension_numbers = #tpu.dot_dimension_numbers<[1], [0], [0], [1], [0, 0, 1, 1], [], []>} : vector<2x128xbf16>, vector<128x64xbf16>, vector<2x64xf32> -> vector<2x64xf32>
    %c0_49 = arith.constant 0 : index
    %c0_50 = arith.constant 0 : index
    %88 = vector.load %arg19[%c0_49, %c0_50] : memref<1x64xf32, #tpu.memory_space<vmem>>, vector<1x64xf32>
    %89 = vector.broadcast %88 : vector<1x64xf32> to vector<2x64xf32>
    %90 = arith.addf %87, %89 : vector<2x64xf32>
    %cst_51 = arith.constant 0.000000e+00 : f32
    %91 = vector.broadcast %cst_51 : f32 to vector<2x64xf32>
    %92 = arith.maximumf %90, %91 : vector<2x64xf32>
    %93 = arith.truncf %92 : vector<2x64xf32> to vector<2x64xbf16>
    %c0_52 = arith.constant 0 : index
    %c0_53 = arith.constant 0 : index
    %94 = vector.load %arg20[%c0_52, %c0_53] : memref<64x64xbf16, #tpu.memory_space<vmem>>, vector<64x64xbf16>
    %cst_54 = arith.constant dense<0.000000e+00> : vector<2x64xf32>
    %95 = tpu.matmul %93, %94, %cst_54 {dimension_numbers = #tpu.dot_dimension_numbers<[1], [0], [0], [1], [0, 0, 1, 1], [], []>} : vector<2x64xbf16>, vector<64x64xbf16>, vector<2x64xf32> -> vector<2x64xf32>
    %c0_55 = arith.constant 0 : index
    %c0_56 = arith.constant 0 : index
    %96 = vector.load %arg21[%c0_55, %c0_56] : memref<1x64xf32, #tpu.memory_space<vmem>>, vector<1x64xf32>
    %97 = vector.broadcast %96 : vector<1x64xf32> to vector<2x64xf32>
    %98 = arith.addf %95, %97 : vector<2x64xf32>
    %cst_57 = arith.constant 0.000000e+00 : f32
    %99 = vector.broadcast %cst_57 : f32 to vector<2x64xf32>
    %100 = arith.maximumf %98, %99 : vector<2x64xf32>
    %101 = arith.truncf %100 : vector<2x64xf32> to vector<2x64xbf16>
    %c0_58 = arith.constant 0 : index
    %c0_59 = arith.constant 0 : index
    %102 = vector.load %arg22[%c0_58, %c0_59] : memref<64x128xbf16, #tpu.memory_space<vmem>>, vector<64x128xbf16>
    %cst_60 = arith.constant dense<0.000000e+00> : vector<2x128xf32>
    %103 = tpu.matmul %101, %102, %cst_60 {dimension_numbers = #tpu.dot_dimension_numbers<[1], [0], [0], [1], [0, 0, 1, 1], [], []>} : vector<2x64xbf16>, vector<64x128xbf16>, vector<2x128xf32> -> vector<2x128xf32>
    %c0_61 = arith.constant 0 : index
    %c0_62 = arith.constant 0 : index
    %104 = vector.load %arg23[%c0_61, %c0_62] : memref<1x128xf32, #tpu.memory_space<vmem>>, vector<1x128xf32>
    %105 = vector.broadcast %104 : vector<1x128xf32> to vector<2x128xf32>
    %106 = arith.addf %103, %105 : vector<2x128xf32>
    %c0_63 = arith.constant 0 : index
    %c0_64 = arith.constant 0 : index
    %107 = vector.load %arg24[%c0_63, %c0_64] : memref<2x128xf32, #tpu.memory_space<vmem>>, vector<2x128xf32>
    tpu.vector_store %arg24[%c0_63, %c0_64], %106 {strides = array<i32>} : memref<2x128xf32, #tpu.memory_space<vmem>>, vector<2x128xf32>,
    return
  }
  func.func @transform_0(%arg0: i32) -> (i32, i32) {
    %c0_i32 = arith.constant 0 : i32
    %c0_i32_0 = arith.constant 0 : i32
    return %arg0, %c0_i32 : i32, i32
  }
  func.func @transform_1(%arg0: i32) -> (i32, i32) {
    %c0_i32 = arith.constant 0 : i32
    %c0_i32_0 = arith.constant 0 : i32
    return %arg0, %c0_i32 : i32, i32
  }
  func.func @transform_2(%arg0: i32) -> (i32, i32) {
    %c0_i32 = arith.constant 0 : i32
    %c0_i32_0 = arith.constant 0 : i32
    return %arg0, %c0_i32 : i32, i32
  }
  func.func @transform_3(%arg0: i32) -> (i32, i32) {
    %c0_i32 = arith.constant 0 : i32
    %c0_i32_0 = arith.constant 0 : i32
    return %arg0, %c0_i32 : i32, i32
  }
  func.func @transform_4(%arg0: i32) -> (i32, i32) {
    %c0_i32 = arith.constant 0 : i32
    %c0_i32_0 = arith.constant 0 : i32
    %c0_i32_1 = arith.constant 0 : i32
    return %c0_i32, %c0_i32_0 : i32, i32
  }
  func.func @transform_5(%arg0: i32) -> (i32, i32) {
    %c0_i32 = arith.constant 0 : i32
    %c0_i32_0 = arith.constant 0 : i32
    %c0_i32_1 = arith.constant 0 : i32
    return %c0_i32, %c0_i32_0 : i32, i32
  }
  func.func @transform_6(%arg0: i32) -> (i32, i32) {
    %c0_i32 = arith.constant 0 : i32
    %c0_i32_0 = arith.constant 0 : i32
    %c0_i32_1 = arith.constant 0 : i32
    return %c0_i32, %c0_i32_0 : i32, i32
  }
  func.func @transform_7(%arg0: i32) -> (i32, i32) {
    %c0_i32 = arith.constant 0 : i32
    %c0_i32_0 = arith.constant 0 : i32
    %c0_i32_1 = arith.constant 0 : i32
    return %c0_i32, %c0_i32_0 : i32, i32
  }
  func.func @transform_8(%arg0: i32) -> (i32, i32) {
    %c0_i32 = arith.constant 0 : i32
    %c0_i32_0 = arith.constant 0 : i32
    %c0_i32_1 = arith.constant 0 : i32
    return %c0_i32, %c0_i32_0 : i32, i32
  }
  func.func @transform_9(%arg0: i32) -> (i32, i32) {
    %c0_i32 = arith.constant 0 : i32
    %c0_i32_0 = arith.constant 0 : i32
    %c0_i32_1 = arith.constant 0 : i32
    return %c0_i32, %c0_i32_0 : i32, i32
  }
  func.func @transform_10(%arg0: i32) -> (i32, i32) {
    %c0_i32 = arith.constant 0 : i32
    %c0_i32_0 = arith.constant 0 : i32
    %c0_i32_1 = arith.constant 0 : i32
    return %c0_i32, %c0_i32_0 : i32, i32
  }
  func.func @transform_11(%arg0: i32) -> (i32, i32) {
    %c0_i32 = arith.constant 0 : i32
    %c0_i32_0 = arith.constant 0 : i32
    %c0_i32_1 = arith.constant 0 : i32
    return %c0_i32, %c0_i32_0 : i32, i32
  }
  func.func @transform_12(%arg0: i32) -> (i32, i32) {
    %c0_i32 = arith.constant 0 : i32
    %c0_i32_0 = arith.constant 0 : i32
    %c0_i32_1 = arith.constant 0 : i32
    return %c0_i32, %c0_i32_0 : i32, i32
  }
  func.func @transform_13(%arg0: i32) -> (i32, i32) {
    %c0_i32 = arith.constant 0 : i32
    %c0_i32_0 = arith.constant 0 : i32
    %c0_i32_1 = arith.constant 0 : i32
    return %c0_i32, %c0_i32_0 : i32, i32
  }
  func.func @transform_14(%arg0: i32) -> (i32, i32) {
    %c0_i32 = arith.constant 0 : i32
    %c0_i32_0 = arith.constant 0 : i32
    %c0_i32_1 = arith.constant 0 : i32
    return %c0_i32, %c0_i32_0 : i32, i32
  }
  func.func @transform_15(%arg0: i32) -> (i32, i32) {
    %c0_i32 = arith.constant 0 : i32
    %c0_i32_0 = arith.constant 0 : i32
    %c0_i32_1 = arith.constant 0 : i32
    return %c0_i32, %c0_i32_0 : i32, i32
  }
  func.func @transform_16(%arg0: i32) -> (i32, i32) {
    %c0_i32 = arith.constant 0 : i32
    %c0_i32_0 = arith.constant 0 : i32
    %c0_i32_1 = arith.constant 0 : i32
    return %c0_i32, %c0_i32_0 : i32, i32
  }
  func.func @transform_17(%arg0: i32) -> (i32, i32) {
    %c0_i32 = arith.constant 0 : i32
    %c0_i32_0 = arith.constant 0 : i32
    %c0_i32_1 = arith.constant 0 : i32
    return %c0_i32, %c0_i32_0 : i32, i32
  }
  func.func @transform_18(%arg0: i32) -> (i32, i32) {
    %c0_i32 = arith.constant 0 : i32
    %c0_i32_0 = arith.constant 0 : i32
    %c0_i32_1 = arith.constant 0 : i32
    return %c0_i32, %c0_i32_0 : i32, i32
  }
  func.func @transform_19(%arg0: i32) -> (i32, i32) {
    %c0_i32 = arith.constant 0 : i32
    %c0_i32_0 = arith.constant 0 : i32
    %c0_i32_1 = arith.constant 0 : i32
    return %c0_i32, %c0_i32_0 : i32, i32
  }
  func.func @transform_20(%arg0: i32) -> (i32, i32) {
    %c0_i32 = arith.constant 0 : i32
    %c0_i32_0 = arith.constant 0 : i32
    %c0_i32_1 = arith.constant 0 : i32
    return %c0_i32, %c0_i32_0 : i32, i32
  }
  func.func @transform_21(%arg0: i32) -> (i32, i32) {
    %c0_i32 = arith.constant 0 : i32
    %c0_i32_0 = arith.constant 0 : i32
    %c0_i32_1 = arith.constant 0 : i32
    return %c0_i32, %c0_i32_0 : i32, i32
  }
  func.func @transform_22(%arg0: i32) -> (i32, i32) {
    %c0_i32 = arith.constant 0 : i32
    %c0_i32_0 = arith.constant 0 : i32
    %c0_i32_1 = arith.constant 0 : i32
    return %c0_i32, %c0_i32_0 : i32, i32
  }
  func.func @transform_23(%arg0: i32) -> (i32, i32) {
    %c0_i32 = arith.constant 0 : i32
    %c0_i32_0 = arith.constant 0 : i32
    return %arg0, %c0_i32 : i32, i32
  }
}

</mosaic_0001>

<llo_original>
// kernel: fwd.1
$region0: #{fwd.1}
  #allocation0 [shape = 'u32[]', space=smem, size = 0x4, offset = 0x4, fixed_abs, tag = 'smem constant byte address 0x4 - core index']
  #allocation1 [shape = 'u32[144,128]{1,0:T(1,128)}', space=vmem, size = 0x12000, scoped, tag = 'internal scratch']
  %s0 = inlined_call_operand.vmem [shape: f32[2,16], index: 0, kind: input, shape index: {}]
  %s1 = inlined_call_operand.vmem [shape: f32[2,48], index: 1, kind: input, shape index: {}]
  %s2 = inlined_call_operand.vmem [shape: f32[2,32], index: 2, kind: input, shape index: {}]
  %s3 = inlined_call_operand.vmem [shape: f32[2,2], index: 3, kind: input, shape index: {}]
  %s4 = inlined_call_operand.hbm [shape: bf16[16,32], index: 4, kind: input, shape index: {}]
  %s5 = inlined_call_operand.hbm [shape: f32[1,32], index: 5, kind: input, shape index: {}]
  %s6 = inlined_call_operand.hbm [shape: f32[2,32], index: 6, kind: input, shape index: {}]
  %s7 = inlined_call_operand.hbm [shape: f32[1,32], index: 7, kind: input, shape index: {}]
  %s8 = inlined_call_operand.hbm [shape: bf16[48,32], index: 8, kind: input, shape index: {}]
  %s9 = inlined_call_operand.hbm [shape: f32[1,32], index: 9, kind: input, shape index: {}]
  %s10 = inlined_call_operand.hbm [shape: bf16[96,200], index: 10, kind: input, shape index: {}]
  %s11 = inlined_call_operand.hbm [shape: f32[1,200], index: 11, kind: input, shape index: {}]
  %s12 = inlined_call_operand.vmem [shape: bf16[192,192], index: 12, kind: input, shape index: {}]
  %s13 = inlined_call_operand.hbm [shape: f32[1,192], index: 13, kind: input, shape index: {}]
  %s14 = inlined_call_operand.hbm [shape: bf16[192,128], index: 14, kind: input, shape index: {}]
  %s15 = inlined_call_operand.hbm [shape: f32[1,128], index: 15, kind: input, shape index: {}]
  %s16 = inlined_call_operand.hbm [shape: bf16[8,128], index: 16, kind: input, shape index: {}]
  %s17 = inlined_call_operand.vmem [shape: bf16[128,64], index: 17, kind: input, shape index: {}]
  %s18 = inlined_call_operand.hbm [shape: f32[1,64], index: 18, kind: input, shape index: {}]
  %s19 = inlined_call_operand.hbm [shape: bf16[64,64], index: 19, kind: input, shape index: {}]
  %s20 = inlined_call_operand.hbm [shape: f32[1,64], index: 20, kind: input, shape index: {}]
  %s21 = inlined_call_operand.hbm [shape: bf16[64,128], index: 21, kind: input, shape index: {}]
  %s22 = inlined_call_operand.hbm [shape: f32[1,128], index: 22, kind: input, shape index: {}]
  %s23 = inlined_call_operand.hbm [shape: f32[2,128], index: 23, kind: output, shape index: {}]
  %s24 = sld [smem:[#allocation0]]
  $region170: #{fwd.1} parent=0
    _
  %s26 = ssub.s32 1, %s24
  %s27 = scalar_select 0, %s26, %s24
  $region1: #{fwd.1} parent=0
    #allocation2 [shape = 'u8[4096]{0}', space=vmem, size = 0x1000, scoped, tag = 'input window, operand 4, single buffered']
    #allocation3 [shape = 's32[1]{0}', space=sflag, size = 0x4, scoped, tag = 'scoped memory for fwd.1']
    #allocation4 [shape = 's32[1]{0}', space=sflag, size = 0x4, scoped, tag = 'scoped memory for fwd.1']
    #allocation5 [shape = 'u8[512]{0}', space=vmem, size = 0x400, scoped, tag = 'input window, operand 5, single buffered']
    #allocation6 [shape = 's32[1]{0}', space=sflag, size = 0x4, scoped, tag = 'scoped memory for fwd.1']
    #allocation7 [shape = 'u8[1024]{0}', space=vmem, size = 0x400, scoped, tag = 'input window, operand 6, single buffered']
    #allocation8 [shape = 'u8[512]{0}', space=vmem, size = 0x400, scoped, tag = 'input window, operand 7, single buffered']
    #allocation9 [shape = 's32[1]{0}', space=sflag, size = 0x4, scoped, tag = 'scoped memory for fwd.1']
    #allocation10 [shape = 'u8[12288]{0}', space=vmem, size = 0x3000, scoped, tag = 'input window, operand 8, single buffered']
    #allocation11 [shape = 'u8[512]{0}', space=vmem, size = 0x400, scoped, tag = 'input window, operand 9, single buffered']
    #allocation12 [shape = 's32[1]{0}', space=sflag, size = 0x4, scoped, tag = 'scoped memory for fwd.1']
    #allocation13 [shape = 'u8[49152]{0}', space=vmem, size = 0xc000, scoped, tag = 'input window, operand 10, single buffered']
    #allocation14 [shape = 'u8[1024]{0}', space=vmem, size = 0x400, scoped, tag = 'input window, operand 11, single buffered']
    #allocation15 [shape = 's32[1]{0}', space=sflag, size = 0x4, scoped, tag = 'scoped memory for fwd.1']
    #allocation16 [shape = 'u8[1024]{0}', space=vmem, size = 0x400, scoped, tag = 'input window, operand 13, single buffered']
    #allocation17 [shape = 'u8[49152]{0}', space=vmem, size = 0xc000, scoped, tag = 'input window, operand 14, single buffered']
    #allocation18 [shape = 's32[1]{0}', space=sflag, size = 0x4, scoped, tag = 'scoped memory for fwd.1']
    #allocation19 [shape = 'u8[512]{0}', space=vmem, size = 0x400, scoped, tag = 'input window, operand 15, single buffered']
    #allocation20 [shape = 'u8[2048]{0}', space=vmem, size = 0x800, scoped, tag = 'input window, operand 16, single buffered']
    #allocation21 [shape = 's32[1]{0}', space=sflag, size = 0x4, scoped, tag = 'scoped memory for fwd.1']
    #allocation22 [shape = 'u8[512]{0}', space=vmem, size = 0x400, scoped, tag = 'input window, operand 18, single buffered']
    #allocation23 [shape = 'u8[16384]{0}', space=vmem, size = 0x4000, scoped, tag = 'input window, operand 19, single buffered']
    #allocation24 [shape = 's32[1]{0}', space=sflag, size = 0x4, scoped, tag = 'scoped memory for fwd.1']
    #allocation25 [shape = 'u8[512]{0}', space=vmem, size = 0x400, scoped, tag = 'input window, operand 20, single buffered']
    #allocation26 [shape = 'u8[16384]{0}', space=vmem, size = 0x4000, scoped, tag = 'input window, operand 21, single buffered']
    #allocation27 [shape = 's32[1]{0}', space=sflag, size = 0x4, scoped, tag = 'scoped memory for fwd.1']
    #allocation28 [shape = 'u8[512]{0}', space=vmem, size = 0x400, scoped, tag = 'input window, operand 22, single buffered']
    #allocation29 [shape = 'u8[1024]{0}', space=vmem, size = 0x400, scoped, tag = 'output window, operand 0, single buffered']
    %28 = vsyncpa [#allocation3], 0
    %29 = vsyncpa [#allocation6], 0
    %30 = vsyncpa [#allocation9], 0
    %31 = vsyncpa [#allocation12], 0
    %32 = vsyncpa [#allocation15], 0
    %33 = vsyncpa [#allocation18], 0
    %34 = vsyncpa [#allocation21], 0
    %35 = vsyncpa [#allocation24], 0
    %36 = vsyncpa [#allocation27], 0
    %37 = vsyncpa [#allocation4], 0
    // Predicated region
    $region2: #{fwd.1} parent=1 // pred_check
      _
    $region3: #{fwd.1} parent=1 // pred_check_branch
      %39 = sbr.rel (0) target = $region5
    $region4: #{fwd.1} parent=1 // pred_region
      _
    $region5: #{fwd.1} parent=1 // pred_fallthru
      _
    // Predicated region
    $region6: #{fwd.1} parent=1 // pred_check
      _
    $region7: #{fwd.1} parent=1 // pred_check_branch
      %41 = sbr.rel (0) target = $region9
    $region8: #{fwd.1} parent=1 // pred_region
      _
    $region9: #{fwd.1} parent=1 // pred_fallthru
      _
    // Predicated region
    $region10: #{fwd.1} parent=1 // pred_check
      _
    $region11: #{fwd.1} parent=1 // pred_check_branch
      %43 = sbr.rel (0) target = $region13
    $region12: #{fwd.1} parent=1 // pred_region
      _
    $region13: #{fwd.1} parent=1 // pred_fallthru
      _
    // Predicated region
    $region14: #{fwd.1} parent=1 // pred_check
      _
    $region15: #{fwd.1} parent=1 // pred_check_branch
      %45 = sbr.rel (0) target = $region17
    $region16: #{fwd.1} parent=1 // pred_region
      _
    $region17: #{fwd.1} parent=1 // pred_fallthru
      _
    // Predicated region
    $region18: #{fwd.1} parent=1 // pred_check
      _
    $region19: #{fwd.1} parent=1 // pred_check_branch
      %47 = sbr.rel (0) target = $region21
    $region20: #{fwd.1} parent=1 // pred_region
      %s49 = ssub.s32 128, 128
      %50 = vsyncadd [#allocation3], %s49
      %s51 = sshll.u32 [#allocation2], 4
      %s52 = int_to_ptr.vmem [resolvable:$true] %s51
      %57 = dma.hbm_to_vmem [thread:$0]  %s4, 128, %s52, [#allocation3], 64, 64, 4
    $region21: #{fwd.1} parent=1 // pred_fallthru
      _
    // Predicated region
    $region22: #{fwd.1} parent=1 // pred_check
      _
    $region23: #{fwd.1} parent=1 // pred_check_branch
      %59 = sbr.rel (0) target = $region25
    $region24: #{fwd.1} parent=1 // pred_region
      %s61 = ssub.s32 16, 16
      %62 = vsyncadd [#allocation6], %s61
      %s64 = sshll.u32 [#allocation5], 4
      %s65 = int_to_ptr.vmem [resolvable:$true] %s64
      %67 = dma.hbm_to_vmem [thread:$0]  %s5, 16, %s65, [#allocation6]
    $region25: #{fwd.1} parent=1 // pred_fallthru
      _
    // Predicated region
    $region26: #{fwd.1} parent=1 // pred_check
      _
    $region27: #{fwd.1} parent=1 // pred_check_branch
      %69 = sbr.rel (0) target = $region29
    $region28: #{fwd.1} parent=1 // pred_region
      %s71 = ssub.s32 32, 32
      %72 = vsyncadd [#allocation6], %s71
      %s74 = sshll.u32 [#allocation7], 4
      %s75 = int_to_ptr.vmem [resolvable:$true] %s74
      %77 = dma.hbm_to_vmem [thread:$0]  %s6, 32, %s75, [#allocation6]
    $region29: #{fwd.1} parent=1 // pred_fallthru
      _
    // Predicated region
    $region30: #{fwd.1} parent=1 // pred_check
      _
    $region31: #{fwd.1} parent=1 // pred_check_branch
      %79 = sbr.rel (0) target = $region33
    $region32: #{fwd.1} parent=1 // pred_region
      %s81 = ssub.s32 16, 16
      %82 = vsyncadd [#allocation9], %s81
      %s84 = sshll.u32 [#allocation8], 4
      %s85 = int_to_ptr.vmem [resolvable:$true] %s84
      %87 = dma.hbm_to_vmem [thread:$0]  %s7, 16, %s85, [#allocation9]
    $region33: #{fwd.1} parent=1 // pred_fallthru
      _
    // Predicated region
    $region34: #{fwd.1} parent=1 // pred_check
      _
    $region35: #{fwd.1} parent=1 // pred_check_branch
      %89 = sbr.rel (0) target = $region37
    $region36: #{fwd.1} parent=1 // pred_region
      %s91 = ssub.s32 384, 384
      %92 = vsyncadd [#allocation9], %s91
      %s93 = sshll.u32 [#allocation10], 4
      %s94 = int_to_ptr.vmem [resolvable:$true] %s93
      %99 = dma.hbm_to_vmem [thread:$0]  %s8, 384, %s94, [#allocation9], 64, 64, 4
    $region37: #{fwd.1} parent=1 // pred_fallthru
      _
    // Predicated region
    $region38: #{fwd.1} parent=1 // pred_check
      _
    $region39: #{fwd.1} parent=1 // pred_check_branch
      %101 = sbr.rel (0) target = $region41
    $region40: #{fwd.1} parent=1 // pred_region
      %s103 = ssub.s32 16, 16
      %104 = vsyncadd [#allocation12], %s103
      %s106 = sshll.u32 [#allocation11], 4
      %s107 = int_to_ptr.vmem [resolvable:$true] %s106
      %109 = dma.hbm_to_vmem [thread:$0]  %s9, 16, %s107, [#allocation12]
    $region41: #{fwd.1} parent=1 // pred_fallthru
      _
    // Predicated region
    $region42: #{fwd.1} parent=1 // pred_check
      _
    $region43: #{fwd.1} parent=1 // pred_check_branch
      %111 = sbr.rel (0) target = $region45
    $region44: #{fwd.1} parent=1 // pred_region
      %s113 = ssub.s32 1536, 1536
      %114 = vsyncadd [#allocation12], %s113
      %s115 = sshll.u32 [#allocation13], 4
      %s116 = int_to_ptr.vmem [resolvable:$true] %s115
      %121 = dma.hbm_to_vmem [thread:$0]  %s10, 1536, %s116, [#allocation12], 128, 128, 8
    $region45: #{fwd.1} parent=1 // pred_fallthru
      _
    // Predicated region
    $region46: #{fwd.1} parent=1 // pred_check
      _
    $region47: #{fwd.1} parent=1 // pred_check_branch
      %123 = sbr.rel (0) target = $region49
    $region48: #{fwd.1} parent=1 // pred_region
      %s125 = ssub.s32 32, 32
      %126 = vsyncadd [#allocation15], %s125
      %s128 = sshll.u32 [#allocation14], 4
      %s129 = int_to_ptr.vmem [resolvable:$true] %s128
      %131 = dma.hbm_to_vmem [thread:$0]  %s11, 32, %s129, [#allocation15]
    $region49: #{fwd.1} parent=1 // pred_fallthru
      _
    // Predicated region
    $region50: #{fwd.1} parent=1 // pred_check
      _
    $region51: #{fwd.1} parent=1 // pred_check_branch
      %133 = sbr.rel (0) target = $region53
    $region52: #{fwd.1} parent=1 // pred_region
      _
    $region53: #{fwd.1} parent=1 // pred_fallthru
      _
    // Predicated region
    $region54: #{fwd.1} parent=1 // pred_check
      _
    $region55: #{fwd.1} parent=1 // pred_check_branch
      %135 = sbr.rel (0) target = $region57
    $region56: #{fwd.1} parent=1 // pred_region
      %s137 = ssub.s32 32, 32
      %138 = vsyncadd [#allocation15], %s137
      %s140 = sshll.u32 [#allocation16], 4
      %s141 = int_to_ptr.vmem [resolvable:$true] %s140
      %143 = dma.hbm_to_vmem [thread:$0]  %s13, 32, %s141, [#allocation15]
    $region57: #{fwd.1} parent=1 // pred_fallthru
      _
    // Predicated region
    $region58: #{fwd.1} parent=1 // pred_check
      _
    $region59: #{fwd.1} parent=1 // pred_check_branch
      %145 = sbr.rel (0) target = $region61
    $region60: #{fwd.1} parent=1 // pred_region
      %s147 = ssub.s32 1536, 1536
      %148 = vsyncadd [#allocation18], %s147
      %s149 = sshll.u32 [#allocation17], 4
      %s150 = int_to_ptr.vmem [resolvable:$true] %s149
      %155 = dma.hbm_to_vmem [thread:$0]  %s14, 1536, %s150, [#allocation18], 64, 64, 4
    $region61: #{fwd.1} parent=1 // pred_fallthru
      _
    // Predicated region
    $region62: #{fwd.1} parent=1 // pred_check
      _
    $region63: #{fwd.1} parent=1 // pred_check_branch
      %157 = sbr.rel (0) target = $region65
    $region64: #{fwd.1} parent=1 // pred_region
      %s159 = ssub.s32 16, 16
      %160 = vsyncadd [#allocation18], %s159
      %s162 = sshll.u32 [#allocation19], 4
      %s163 = int_to_ptr.vmem [resolvable:$true] %s162
      %165 = dma.hbm_to_vmem [thread:$0]  %s15, 16, %s163, [#allocation18]
    $region65: #{fwd.1} parent=1 // pred_fallthru
      _
    // Predicated region
    $region66: #{fwd.1} parent=1 // pred_check
      _
    $region67: #{fwd.1} parent=1 // pred_check_branch
      %167 = sbr.rel (0) target = $region69
    $region68: #{fwd.1} parent=1 // pred_region
      %s169 = ssub.s32 64, 64
      %170 = vsyncadd [#allocation21], %s169
      %s172 = sshll.u32 [#allocation20], 4
      %s173 = int_to_ptr.vmem [resolvable:$true] %s172
      %175 = dma.hbm_to_vmem [thread:$0]  %s16, 64, %s173, [#allocation21]
    $region69: #{fwd.1} parent=1 // pred_fallthru
      _
    // Predicated region
    $region70: #{fwd.1} parent=1 // pred_check
      _
    $region71: #{fwd.1} parent=1 // pred_check_branch
      %177 = sbr.rel (0) target = $region73
    $region72: #{fwd.1} parent=1 // pred_region
      _
    $region73: #{fwd.1} parent=1 // pred_fallthru
      _
    // Predicated region
    $region74: #{fwd.1} parent=1 // pred_check
      _
    $region75: #{fwd.1} parent=1 // pred_check_branch
      %179 = sbr.rel (0) target = $region77
    $region76: #{fwd.1} parent=1 // pred_region
      %s181 = ssub.s32 16, 16
      %182 = vsyncadd [#allocation21], %s181
      %s184 = sshll.u32 [#allocation22], 4
      %s185 = int_to_ptr.vmem [resolvable:$true] %s184
      %187 = dma.hbm_to_vmem [thread:$0]  %s18, 16, %s185, [#allocation21]
    $region77: #{fwd.1} parent=1 // pred_fallthru
      _
    // Predicated region
    $region78: #{fwd.1} parent=1 // pred_check
      _
    $region79: #{fwd.1} parent=1 // pred_check_branch
      %189 = sbr.rel (0) target = $region81
    $region80: #{fwd.1} parent=1 // pred_region
      %s191 = ssub.s32 512, 512
      %192 = vsyncadd [#allocation24], %s191
      %s193 = sshll.u32 [#allocation23], 4
      %s194 = int_to_ptr.vmem [resolvable:$true] %s193
      %199 = dma.hbm_to_vmem [thread:$0]  %s19, 512, %s194, [#allocation24], 64, 64, 4
    $region81: #{fwd.1} parent=1 // pred_fallthru
      _
    // Predicated region
    $region82: #{fwd.1} parent=1 // pred_check
      _
    $region83: #{fwd.1} parent=1 // pred_check_branch
      %201 = sbr.rel (0) target = $region85
    $region84: #{fwd.1} parent=1 // pred_region
      %s203 = ssub.s32 16, 16
      %204 = vsyncadd [#allocation24], %s203
      %s206 = sshll.u32 [#allocation25], 4
      %s207 = int_to_ptr.vmem [resolvable:$true] %s206
      %209 = dma.hbm_to_vmem [thread:$0]  %s20, 16, %s207, [#allocation24]
    $region85: #{fwd.1} parent=1 // pred_fallthru
      _
    // Predicated region
    $region86: #{fwd.1} parent=1 // pred_check
      _
    $region87: #{fwd.1} parent=1 // pred_check_branch
      %211 = sbr.rel (0) target = $region89
    $region88: #{fwd.1} parent=1 // pred_region
      %s213 = ssub.s32 512, 512
      %214 = vsyncadd [#allocation27], %s213
      %s215 = sshll.u32 [#allocation26], 4
      %s216 = int_to_ptr.vmem [resolvable:$true] %s215
      %221 = dma.hbm_to_vmem [thread:$0]  %s21, 512, %s216, [#allocation27], 64, 64, 4
    $region89: #{fwd.1} parent=1 // pred_fallthru
      _
    // Predicated region
    $region90: #{fwd.1} parent=1 // pred_check
      _
    $region91: #{fwd.1} parent=1 // pred_check_branch
      %223 = sbr.rel (0) target = $region93
    $region92: #{fwd.1} parent=1 // pred_region
      %s225 = ssub.s32 16, 16
      %226 = vsyncadd [#allocation27], %s225
      %s228 = sshll.u32 [#allocation28], 4
      %s229 = int_to_ptr.vmem [resolvable:$true] %s228
      %231 = dma.hbm_to_vmem [thread:$0]  %s22, 16, %s229, [#allocation27]
    $region93: #{fwd.1} parent=1 // pred_fallthru
      _
    // Predicated region
    $region94: #{fwd.1} parent=1 // pred_check
      _
    $region95: #{fwd.1} parent=1 // pred_check_branch
      %233 = sbr.rel (0) target = $region97
    $region96: #{fwd.1} parent=1 // pred_region
      %234 = dma.done [#allocation3], 128
    $region97: #{fwd.1} parent=1 // pred_fallthru
      _
    // Predicated region
    $region98: #{fwd.1} parent=1 // pred_check
      _
    $region99: #{fwd.1} parent=1 // pred_check_branch
      %236 = sbr.rel (0) target = $region101
    $region100: #{fwd.1} parent=1 // pred_region
      %237 = dma.done [#allocation6], 16
    $region101: #{fwd.1} parent=1 // pred_fallthru
      _
    // Predicated region
    $region102: #{fwd.1} parent=1 // pred_check
      _
    $region103: #{fwd.1} parent=1 // pred_check_branch
      %239 = sbr.rel (0) target = $region105
    $region104: #{fwd.1} parent=1 // pred_region
      %240 = dma.done [#allocation6], 32
    $region105: #{fwd.1} parent=1 // pred_fallthru
      _
    // Predicated region
    $region106: #{fwd.1} parent=1 // pred_check
      _
    $region107: #{fwd.1} parent=1 // pred_check_branch
      %242 = sbr.rel (0) target = $region109
    $region108: #{fwd.1} parent=1 // pred_region
      %243 = dma.done [#allocation9], 16
    $region109: #{fwd.1} parent=1 // pred_fallthru
      _
    // Predicated region
    $region110: #{fwd.1} parent=1 // pred_check
      _
    $region111: #{fwd.1} parent=1 // pred_check_branch
      %245 = sbr.rel (0) target = $region113
    $region112: #{fwd.1} parent=1 // pred_region
      %246 = dma.done [#allocation9], 384
    $region113: #{fwd.1} parent=1 // pred_fallthru
      _
    // Predicated region
    $region114: #{fwd.1} parent=1 // pred_check
      _
    $region115: #{fwd.1} parent=1 // pred_check_branch
      %248 = sbr.rel (0) target = $region117
    $region116: #{fwd.1} parent=1 // pred_region
      %249 = dma.done [#allocation12], 16
    $region117: #{fwd.1} parent=1 // pred_fallthru
      _
    // Predicated region
    $region118: #{fwd.1} parent=1 // pred_check
      _
    $region119: #{fwd.1} parent=1 // pred_check_branch
      %251 = sbr.rel (0) target = $region121
    $region120: #{fwd.1} parent=1 // pred_region
      %252 = dma.done [#allocation12], 1536
    $region121: #{fwd.1} parent=1 // pred_fallthru
      _
    // Predicated region
    $region122: #{fwd.1} parent=1 // pred_check
      _
    $region123: #{fwd.1} parent=1 // pred_check_branch
      %254 = sbr.rel (0) target = $region125
    $region124: #{fwd.1} parent=1 // pred_region
      %255 = dma.done [#allocation15], 32
    $region125: #{fwd.1} parent=1 // pred_fallthru
      _
    // Predicated region
    $region126: #{fwd.1} parent=1 // pred_check
      _
    $region127: #{fwd.1} parent=1 // pred_check_branch
      %257 = sbr.rel (0) target = $region129
    $region128: #{fwd.1} parent=1 // pred_region
      %258 = dma.done [#allocation15], 32
    $region129: #{fwd.1} parent=1 // pred_fallthru
      _
    // Predicated region
    $region130: #{fwd.1} parent=1 // pred_check
      _
    $region131: #{fwd.1} parent=1 // pred_check_branch
      %260 = sbr.rel (0) target = $region133
    $region132: #{fwd.1} parent=1 // pred_region
      %261 = dma.done [#allocation18], 1536
    $region133: #{fwd.1} parent=1 // pred_fallthru
      _
    // Predicated region
    $region134: #{fwd.1} parent=1 // pred_check
      _
    $region135: #{fwd.1} parent=1 // pred_check_branch
      %263 = sbr.rel (0) target = $region137
    $region136: #{fwd.1} parent=1 // pred_region
      %264 = dma.done [#allocation18], 16
    $region137: #{fwd.1} parent=1 // pred_fallthru
      _
    // Predicated region
    $region138: #{fwd.1} parent=1 // pred_check
      _
    $region139: #{fwd.1} parent=1 // pred_check_branch
      %266 = sbr.rel (0) target = $region141
    $region140: #{fwd.1} parent=1 // pred_region
      %267 = dma.done [#allocation21], 64
    $region141: #{fwd.1} parent=1 // pred_fallthru
      _
    // Predicated region
    $region142: #{fwd.1} parent=1 // pred_check
      _
    $region143: #{fwd.1} parent=1 // pred_check_branch
      %269 = sbr.rel (0) target = $region145
    $region144: #{fwd.1} parent=1 // pred_region
      %270 = dma.done [#allocation21], 16
    $region145: #{fwd.1} parent=1 // pred_fallthru
      _
    // Predicated region
    $region146: #{fwd.1} parent=1 // pred_check
      _
    $region147: #{fwd.1} parent=1 // pred_check_branch
      %272 = sbr.rel (0) target = $region149
    $region148: #{fwd.1} parent=1 // pred_region
      %273 = dma.done [#allocation24], 512
    $region149: #{fwd.1} parent=1 // pred_fallthru
      _
    // Predicated region
    $region150: #{fwd.1} parent=1 // pred_check
      _
    $region151: #{fwd.1} parent=1 // pred_check_branch
      %275 = sbr.rel (0) target = $region153
    $region152: #{fwd.1} parent=1 // pred_region
      %276 = dma.done [#allocation24], 16
    $region153: #{fwd.1} parent=1 // pred_fallthru
      _
    // Predicated region
    $region154: #{fwd.1} parent=1 // pred_check
      _
    $region155: #{fwd.1} parent=1 // pred_check_branch
      %278 = sbr.rel (0) target = $region157
    $region156: #{fwd.1} parent=1 // pred_region
      %279 = dma.done [#allocation27], 512
    $region157: #{fwd.1} parent=1 // pred_fallthru
      _
    // Predicated region
    $region158: #{fwd.1} parent=1 // pred_check
      _
    $region159: #{fwd.1} parent=1 // pred_check_branch
      %281 = sbr.rel (0) target = $region161
    $region160: #{fwd.1} parent=1 // pred_region
      %282 = dma.done [#allocation27], 16
    $region161: #{fwd.1} parent=1 // pred_fallthru
      _
    %v284 = vld [vmem:[%s0] sm:$0x3]
    %v285 = vpack.c.bf16 %v284, %v284
    %v286 = vld [vmem:[#allocation2] sm:$0xf]
    %v287 = vld [vmem:[#allocation2 + $0x4] sm:$0xf]
    %v288 = vld [vmem:[#allocation5] sm:$0x1]
    %v290 = vlaneseq
    %v291 = vshrl.u32 %v290, 7
    %v292 = vsub.s32 0, %v291
    %v293 = vrot.slane %v288, %v292
    %v297 = vunpack.c.l.b16 %v286
    %v298 = vunpack.c.l.b16 %v287
    %v299 = vpack.c.b16 %v298, %v297
    %vm301 = vcmask 130048
    %v303 = vsel %vm301, %v285, 0
    %305 = vmatprep.subr.bf16.mxu0 0
    %306 = vmatpush1.bf16.msra.mxu0 0
    %307 = vmatprep.subr.bf16.mxu0 0
    %308 = vmatpush1.bf16.msra.mxu0 0
    %309 = vmatprep.subr.bf16.mxu0 0
    %310 = vmatpush1.bf16.msra.mxu0 0
    %311 = vmatprep.subr.bf16.mxu0 0
    %312 = vmatpush1.bf16.msra.mxu0 0
    %313 = vmatprep.subr.bf16.mxu0 0
    %314 = vmatpush1.bf16.msra.mxu0 0
    %315 = vmatprep.subr.bf16.mxu0 0
    %316 = vmatpush1.bf16.msra.mxu0 0
    %317 = vmatprep.subr.bf16.mxu0 0
    %318 = vmatpush1.bf16.msra.mxu0 0
    %319 = vmatprep.subr.bf16.mxu0 0
    %320 = vmatpush1.bf16.msra.mxu0 %v299
    %321 = vmatprep.subr.bf16.mxu0 0
    %322 = vmatpush2.bf16.msra.mxu0 0
    %323 = vmatprep.subr.bf16.mxu0 0
    %324 = vmatpush2.bf16.msra.mxu0 0
    %325 = vmatprep.subr.bf16.mxu0 0
    %326 = vmatpush2.bf16.msra.mxu0 0
    %327 = vmatprep.subr.bf16.mxu0 0
    %328 = vmatpush2.bf16.msra.mxu0 0
    %329 = vmatprep.subr.bf16.mxu0 0
    %330 = vmatpush2.bf16.msra.mxu0 0
    %331 = vmatprep.subr.bf16.mxu0 0
    %332 = vmatpush2.bf16.msra.mxu0 0
    %333 = vmatprep.subr.bf16.mxu0 0
    %334 = vmatpush2.bf16.msra.mxu0 0
    %335 = vmatprep.subr.bf16.mxu0 0
    %336 = vmatpush2.bf16.msra.mxu0 0
    %337 = vmatprep.mubr.bf16.mxu0 0
    %338 = vmatmul.mubr.bf16.gmra.mxu0 %v303
    %v339 = vpop.f32.mrf.mxu0
    %v340 = vadd.f32 %v293, %v339
    %v341 = vpop.f32.mrf.mxu0
    %v342 = vpop.f32.mrf.mxu0
    %v343 = vpop.f32.mrf.mxu0
    %344 = vdwg.mxu0
    %v345 = vmax.f32 %v340, 0.0
    %v346 = vld [vmem:[%s1] sm:$0x3]
    %v347 = vpack.c.bf16 %v346, %v346
    %v348 = vld [vmem:[#allocation10] sm:$0xf]
    %v349 = vld [vmem:[#allocation10 + $0x4] sm:$0xf]
    %v350 = vld [vmem:[#allocation10 + $0x8] sm:$0xf]
    %v351 = vld [vmem:[#allocation10 + $0xc] sm:$0xf]
    %v352 = vld [vmem:[#allocation10 + $0x10] sm:$0xf]
    %v353 = vld [vmem:[#allocation10 + $0x14] sm:$0xf]
    %v354 = vld [vmem:[#allocation11] sm:$0x1]
    %v356 = vlaneseq
    %v357 = vshrl.u32 %v356, 7
    %v358 = vsub.s32 0, %v357
    %v359 = vrot.slane %v354, %v358
    %v367 = vunpack.c.l.b16 %v348
    %v368 = vunpack.c.l.b16 %v349
    %v369 = vunpack.c.l.b16 %v350
    %v370 = vunpack.c.l.b16 %v351
    %v371 = vunpack.c.l.b16 %v352
    %v372 = vunpack.c.l.b16 %v353
    %v373 = vpack.c.b16 %v368, %v367
    %v374 = vpack.c.b16 %v370, %v369
    %v375 = vpack.c.b16 %v372, %v371
    %vm379 = vcmask 392192
    %v381 = vsel %vm379, %v347, 0
    %383 = vmatprep.subr.bf16.mxu0 0
    %384 = vmatpush1.bf16.msra.mxu0 0
    %385 = vmatprep.subr.bf16.mxu0 0
    %386 = vmatpush1.bf16.msra.mxu0 0
    %387 = vmatprep.subr.bf16.mxu0 0
    %388 = vmatpush1.bf16.msra.mxu0 0
    %389 = vmatprep.subr.bf16.mxu0 0
    %390 = vmatpush1.bf16.msra.mxu0 0
    %391 = vmatprep.subr.bf16.mxu0 0
    %392 = vmatpush1.bf16.msra.mxu0 0
    %393 = vmatprep.subr.bf16.mxu0 0
    %394 = vmatpush1.bf16.msra.mxu0 %v375
    %395 = vmatprep.subr.bf16.mxu0 0
    %396 = vmatpush1.bf16.msra.mxu0 %v374
    %397 = vmatprep.subr.bf16.mxu0 0
    %398 = vmatpush1.bf16.msra.mxu0 %v373
    %399 = vmatprep.subr.bf16.mxu0 0
    %400 = vmatpush2.bf16.msra.mxu0 0
    %401 = vmatprep.subr.bf16.mxu0 0
    %402 = vmatpush2.bf16.msra.mxu0 0
    %403 = vmatprep.subr.bf16.mxu0 0
    %404 = vmatpush2.bf16.msra.mxu0 0
    %405 = vmatprep.subr.bf16.mxu0 0
    %406 = vmatpush2.bf16.msra.mxu0 0
    %407 = vmatprep.subr.bf16.mxu0 0
    %408 = vmatpush2.bf16.msra.mxu0 0
    %409 = vmatprep.subr.bf16.mxu0 0
    %410 = vmatpush2.bf16.msra.mxu0 0
    %411 = vmatprep.subr.bf16.mxu0 0
    %412 = vmatpush2.bf16.msra.mxu0 0
    %413 = vmatprep.subr.bf16.mxu0 0
    %414 = vmatpush2.bf16.msra.mxu0 0
    %415 = vmatprep.mubr.bf16.mxu0 0
    %416 = vmatmul.mubr.bf16.gmra.mxu0 %v381
    %v417 = vpop.f32.mrf.mxu0
    %v418 = vadd.f32 %v359, %v417
    %v419 = vpop.f32.mrf.mxu0
    %v420 = vpop.f32.mrf.mxu0
    %v421 = vpop.f32.mrf.mxu0
    %422 = vdwg.mxu0
    %v423 = vld [vmem:[%s3] sm:$0x3]
    %v424 = vld [vmem:[%s2] sm:$0x3]
    %v425 = vld [vmem:[#allocation7] sm:$0x1]
    %427 = vset.pattern.permute.xlu0 0
    %428 = vperm.xlu0 %427, %v423
    %v429 = vpop.permute.xlu0 %428
    %v431 = vlaneseq
    %v432 = vshrl.u32 %v431, 7
    %v433 = vsub.s32 0, %v432
    %v434 = vrot.slane %v425, %v433
    %v435 = vmul.f32 %v429, %v434
    %v436 = vadd.f32 %v424, %v435
    %v437 = vld [vmem:[#allocation7 + $0x1] sm:$0x1]
    %438 = vset.pattern.permute.xlu0 1
    %439 = vperm.xlu0 %438, %v423
    %v440 = vpop.permute.xlu0 %439
    %v442 = vlaneseq
    %v443 = vshrl.u32 %v442, 7
    %v444 = vsub.s32 0, %v443
    %v445 = vrot.slane %v437, %v444
    %v446 = vmul.f32 %v440, %v445
    %v447 = vadd.f32 %v436, %v446
    %v448 = vld [vmem:[#allocation8] sm:$0x1]
    %v450 = vlaneseq
    %v451 = vshrl.u32 %v450, 7
    %v452 = vsub.s32 0, %v451
    %v453 = vrot.slane %v448, %v452
    %v455 = vadd.f32 %v447, %v453
    %457 = vrot.lane.b32.xlu0 %v418, 32
    %v458 = vpop.permute.xlu0 %457
    %461 = vrot.lane.b32.xlu0 %v455, 64
    %v462 = vpop.permute.xlu0 %461
    %vm464 = vcmask 261120
    %v465 = vsel %vm464, %v345, %v458
    %vm466 = vcmask 523264
    %v467 = vsel %vm466, %v465, %v462
    %v468 = vpack.c.bf16 %v467, %v467
    %v469 = vld [vmem:[#allocation13] sm:$0xff]
    %v470 = vld [vmem:[#allocation13 + $0x8] sm:$0xff]
    %v471 = vld [vmem:[#allocation13 + $0x10] sm:$0xff]
    %v472 = vld [vmem:[#allocation13 + $0x18] sm:$0xff]
    %v473 = vld [vmem:[#allocation13 + $0x20] sm:$0xff]
    %v474 = vld [vmem:[#allocation13 + $0x28] sm:$0xff]
    %v475 = vld [vmem:[#allocation13 + $0x30] sm:$0xff]
    %v476 = vld [vmem:[#allocation13 + $0x38] sm:$0xff]
    %v477 = vld [vmem:[#allocation13 + $0x40] sm:$0xff]
    %v478 = vld [vmem:[#allocation13 + $0x48] sm:$0xff]
    %v479 = vld [vmem:[#allocation13 + $0x50] sm:$0xff]
    %v480 = vld [vmem:[#allocation13 + $0x58] sm:$0xff]
    %v481 = vld [vmem:[#allocation14] sm:$0x3]
    %v483 = vlaneseq
    %v484 = vshrl.u32 %v483, 7
    %v485 = vsub.s32 0, %v484
    %v486 = vrot.slane %v481, %v485
    %v487 = vlaneseq
    %v488 = vshrl.u32 %v487, 7
    %v489 = vsub.s32 1, %v488
    %v490 = vrot.slane %v481, %v489
    %v505 = vunpack.c.l.b16 %v469
    %v506 = vunpack.c.h.b16 %v469
    %v507 = vunpack.c.l.b16 %v470
    %v508 = vunpack.c.h.b16 %v470
    %v509 = vunpack.c.l.b16 %v471
    %v510 = vunpack.c.h.b16 %v471
    %v511 = vunpack.c.l.b16 %v472
    %v512 = vunpack.c.h.b16 %v472
    %v513 = vunpack.c.l.b16 %v473
    %v514 = vunpack.c.h.b16 %v473
    %v515 = vunpack.c.l.b16 %v474
    %v516 = vunpack.c.h.b16 %v474
    %v517 = vunpack.c.l.b16 %v475
    %v518 = vunpack.c.h.b16 %v475
    %v519 = vunpack.c.l.b16 %v476
    %v520 = vunpack.c.h.b16 %v476
    %v521 = vunpack.c.l.b16 %v477
    %v522 = vunpack.c.h.b16 %v477
    %v523 = vunpack.c.l.b16 %v478
    %v524 = vunpack.c.h.b16 %v478
    %v525 = vunpack.c.l.b16 %v479
    %v526 = vunpack.c.h.b16 %v479
    %v527 = vunpack.c.l.b16 %v480
    %v528 = vunpack.c.h.b16 %v480
    %v529 = vpack.c.b16 %v507, %v505
    %v530 = vpack.c.b16 %v508, %v506
    %v531 = vpack.c.b16 %v511, %v509
    %v532 = vpack.c.b16 %v512, %v510
    %v533 = vpack.c.b16 %v515, %v513
    %v534 = vpack.c.b16 %v516, %v514
    %v535 = vpack.c.b16 %v519, %v517
    %v536 = vpack.c.b16 %v520, %v518
    %v537 = vpack.c.b16 %v523, %v521
    %v538 = vpack.c.b16 %v524, %v522
    %v539 = vpack.c.b16 %v527, %v525
    %v540 = vpack.c.b16 %v528, %v526
    %vm553 = vcmask 785408
    %v555 = vsel %vm553, %v468, 0
    %557 = vmatprep.subr.bf16.mxu0 0
    %558 = vmatpush1.bf16.msra.mxu0 0
    %559 = vmatprep.subr.bf16.mxu0 0
    %560 = vmatpush1.bf16.msra.mxu0 0
    %561 = vmatprep.subr.bf16.mxu0 %v540
    %562 = vmatpush1.bf16.msra.mxu0 %v539
    %563 = vmatprep.subr.bf16.mxu0 %v538
    %564 = vmatpush1.bf16.msra.mxu0 %v537
    %565 = vmatprep.subr.bf16.mxu0 %v536
    %566 = vmatpush1.bf16.msra.mxu0 %v535
    %567 = vmatprep.subr.bf16.mxu0 %v534
    %568 = vmatpush1.bf16.msra.mxu0 %v533
    %569 = vmatprep.subr.bf16.mxu0 %v532
    %570 = vmatpush1.bf16.msra.mxu0 %v531
    %571 = vmatprep.subr.bf16.mxu0 %v530
    %572 = vmatpush1.bf16.msra.mxu0 %v529
    %573 = vmatprep.subr.bf16.mxu0 0
    %574 = vmatpush2.bf16.msra.mxu0 0
    %575 = vmatprep.subr.bf16.mxu0 0
    %576 = vmatpush2.bf16.msra.mxu0 0
    %577 = vmatprep.subr.bf16.mxu0 0
    %578 = vmatpush2.bf16.msra.mxu0 0
    %579 = vmatprep.subr.bf16.mxu0 0
    %580 = vmatpush2.bf16.msra.mxu0 0
    %581 = vmatprep.subr.bf16.mxu0 0
    %582 = vmatpush2.bf16.msra.mxu0 0
    %583 = vmatprep.subr.bf16.mxu0 0
    %584 = vmatpush2.bf16.msra.mxu0 0
    %585 = vmatprep.subr.bf16.mxu0 0
    %586 = vmatpush2.bf16.msra.mxu0 0
    %587 = vmatprep.subr.bf16.mxu0 0
    %588 = vmatpush2.bf16.msra.mxu0 0
    %589 = vmatprep.mubr.bf16.mxu0 0
    %590 = vmatmul.mubr.bf16.gmra.mxu0 %v555
    %v591 = vpop.f32.mrf.mxu0
    %v592 = vadd.f32 %v486, %v591
    %v593 = vpop.f32.mrf.mxu0
    %v594 = vadd.f32 %v490, %v593
    %v595 = vpop.f32.mrf.mxu0
    %v596 = vpop.f32.mrf.mxu0
    %597 = vdwg.mxu0
    %v598 = vmax.f32 %v592, 0.0
    %v599 = vmax.f32 %v594, 0.0
    %v600 = vpack.c.bf16 %v598, %v598
    %v601 = vpack.c.bf16 %v599, %v599
    %v602 = vld [vmem:[%s12] sm:$0xff]
    %v603 = vld [vmem:[%s12 + $0x8] sm:$0xff]
    %v604 = vld [vmem:[%s12 + $0x10] sm:$0xff]
    %v605 = vld [vmem:[%s12 + $0x18] sm:$0xff]
    %v606 = vld [vmem:[%s12 + $0x20] sm:$0xff]
    %v607 = vld [vmem:[%s12 + $0x28] sm:$0xff]
    %v608 = vld [vmem:[%s12 + $0x30] sm:$0xff]
    %v609 = vld [vmem:[%s12 + $0x38] sm:$0xff]
    %v610 = vld [vmem:[%s12 + $0x40] sm:$0xff]
    %v611 = vld [vmem:[%s12 + $0x48] sm:$0xff]
    %v612 = vld [vmem:[%s12 + $0x50] sm:$0xff]
    %v613 = vld [vmem:[%s12 + $0x58] sm:$0xff]
    %v614 = vld [vmem:[%s12 + $0x60] sm:$0xff]
    %v615 = vld [vmem:[%s12 + $0x68] sm:$0xff]
    %v616 = vld [vmem:[%s12 + $0x70] sm:$0xff]
    %v617 = vld [vmem:[%s12 + $0x78] sm:$0xff]
    %v618 = vld [vmem:[%s12 + $0x80] sm:$0xff]
    %v619 = vld [vmem:[%s12 + $0x88] sm:$0xff]
    %v620 = vld [vmem:[%s12 + $0x90] sm:$0xff]
    %v621 = vld [vmem:[%s12 + $0x98] sm:$0xff]
    %v622 = vld [vmem:[%s12 + $0xa0] sm:$0xff]
    %v623 = vld [vmem:[%s12 + $0xa8] sm:$0xff]
    %v624 = vld [vmem:[%s12 + $0xb0] sm:$0xff]
    %v625 = vld [vmem:[%s12 + $0xb8] sm:$0xff]
    %v626 = vld [vmem:[#allocation16] sm:$0x3]
    %v628 = vlaneseq
    %v629 = vshrl.u32 %v628, 7
    %v630 = vsub.s32 0, %v629
    %v631 = vrot.slane %v626, %v630
    %v632 = vlaneseq
    %v633 = vshrl.u32 %v632, 7
    %v634 = vsub.s32 1, %v633
    %v635 = vrot.slane %v626, %v634
    %v662 = vunpack.c.l.b16 %v602
    %v663 = vunpack.c.h.b16 %v602
    %v664 = vunpack.c.l.b16 %v603
    %v665 = vunpack.c.h.b16 %v603
    %v666 = vunpack.c.l.b16 %v604
    %v667 = vunpack.c.h.b16 %v604
    %v668 = vunpack.c.l.b16 %v605
    %v669 = vunpack.c.h.b16 %v605
    %v670 = vunpack.c.l.b16 %v606
    %v671 = vunpack.c.h.b16 %v606
    %v672 = vunpack.c.l.b16 %v607
    %v673 = vunpack.c.h.b16 %v607
    %v674 = vunpack.c.l.b16 %v608
    %v675 = vunpack.c.h.b16 %v608
    %v676 = vunpack.c.l.b16 %v609
    %v677 = vunpack.c.h.b16 %v609
    %v678 = vunpack.c.l.b16 %v610
    %v679 = vunpack.c.h.b16 %v610
    %v680 = vunpack.c.l.b16 %v611
    %v681 = vunpack.c.h.b16 %v611
    %v682 = vunpack.c.l.b16 %v612
    %v683 = vunpack.c.h.b16 %v612
    %v684 = vunpack.c.l.b16 %v613
    %v685 = vunpack.c.h.b16 %v613
    %v686 = vunpack.c.l.b16 %v614
    %v687 = vunpack.c.h.b16 %v614
    %v688 = vunpack.c.l.b16 %v615
    %v689 = vunpack.c.h.b16 %v615
    %v690 = vunpack.c.l.b16 %v616
    %v691 = vunpack.c.h.b16 %v616
    %v692 = vunpack.c.l.b16 %v617
    %v693 = vunpack.c.h.b16 %v617
    %v694 = vunpack.c.l.b16 %v618
    %v695 = vunpack.c.h.b16 %v618
    %v696 = vunpack.c.l.b16 %v619
    %v697 = vunpack.c.h.b16 %v619
    %v698 = vunpack.c.l.b16 %v620
    %v699 = vunpack.c.h.b16 %v620
    %v700 = vunpack.c.l.b16 %v621
    %v701 = vunpack.c.h.b16 %v621
    %v702 = vunpack.c.l.b16 %v622
    %v703 = vunpack.c.h.b16 %v622
    %v704 = vunpack.c.l.b16 %v623
    %v705 = vunpack.c.h.b16 %v623
    %v706 = vunpack.c.l.b16 %v624
    %v707 = vunpack.c.h.b16 %v624
    %v708 = vunpack.c.l.b16 %v625
    %v709 = vunpack.c.h.b16 %v625
    %v710 = vpack.c.b16 %v664, %v662
    %v711 = vpack.c.b16 %v665, %v663
    %v712 = vpack.c.b16 %v668, %v666
    %v713 = vpack.c.b16 %v669, %v667
    %v714 = vpack.c.b16 %v672, %v670
    %v715 = vpack.c.b16 %v673, %v671
    %v716 = vpack.c.b16 %v676, %v674
    %v717 = vpack.c.b16 %v677, %v675
    %v718 = vpack.c.b16 %v680, %v678
    %v719 = vpack.c.b16 %v681, %v679
    %v720 = vpack.c.b16 %v684, %v682
    %v721 = vpack.c.b16 %v685, %v683
    %v722 = vpack.c.b16 %v688, %v686
    %v723 = vpack.c.b16 %v689, %v687
    %v724 = vpack.c.b16 %v692, %v690
    %v725 = vpack.c.b16 %v693, %v691
    %v726 = vpack.c.b16 %v696, %v694
    %v727 = vpack.c.b16 %v697, %v695
    %v728 = vpack.c.b16 %v700, %v698
    %v729 = vpack.c.b16 %v701, %v699
    %v730 = vpack.c.b16 %v704, %v702
    %v731 = vpack.c.b16 %v705, %v703
    %v732 = vpack.c.b16 %v708, %v706
    %v733 = vpack.c.b16 %v709, %v707
    %v759 = vsel %vm466, %v601, 0
    %761 = vmatprep.subr.bf16.mxu0 %v725
    %762 = vmatpush1.bf16.msra.mxu0 %v724
    %763 = vmatprep.subr.bf16.mxu0 %v723
    %764 = vmatpush1.bf16.msra.mxu0 %v722
    %765 = vmatprep.subr.bf16.mxu0 %v721
    %766 = vmatpush1.bf16.msra.mxu0 %v720
    %767 = vmatprep.subr.bf16.mxu0 %v719
    %768 = vmatpush1.bf16.msra.mxu0 %v718
    %769 = vmatprep.subr.bf16.mxu0 %v717
    %770 = vmatpush1.bf16.msra.mxu0 %v716
    %771 = vmatprep.subr.bf16.mxu0 %v715
    %772 = vmatpush1.bf16.msra.mxu0 %v714
    %773 = vmatprep.subr.bf16.mxu0 %v713
    %774 = vmatpush1.bf16.msra.mxu0 %v712
    %775 = vmatprep.subr.bf16.mxu0 %v711
    %776 = vmatpush1.bf16.msra.mxu0 %v710
    %777 = vmatprep.subr.bf16.mxu0 0
    %778 = vmatpush2.bf16.msra.mxu0 0
    %779 = vmatprep.subr.bf16.mxu0 0
    %780 = vmatpush2.bf16.msra.mxu0 0
    %781 = vmatprep.subr.bf16.mxu0 0
    %782 = vmatpush2.bf16.msra.mxu0 0
    %783 = vmatprep.subr.bf16.mxu0 0
    %784 = vmatpush2.bf16.msra.mxu0 0
    %785 = vmatprep.subr.bf16.mxu0 %v733
    %786 = vmatpush2.bf16.msra.mxu0 %v732
    %787 = vmatprep.subr.bf16.mxu0 %v731
    %788 = vmatpush2.bf16.msra.mxu0 %v730
    %789 = vmatprep.subr.bf16.mxu0 %v729
    %790 = vmatpush2.bf16.msra.mxu0 %v728
    %791 = vmatprep.subr.bf16.mxu0 %v727
    %792 = vmatpush2.bf16.msra.mxu0 %v726
    %793 = vmatprep.mubr.bf16.mxu0 %v759
    %794 = vmatmul.mubr.bf16.gmra.mxu0 %v600
    %v795 = vpop.f32.mrf.mxu0
    %v796 = vadd.f32 %v631, %v795
    %v797 = vpop.f32.mrf.mxu0
    %v798 = vadd.f32 %v635, %v797
    %v799 = vpop.f32.mrf.mxu0
    %v800 = vpop.f32.mrf.mxu0
    %801 = vdwg.mxu0
    %v802 = vmax.f32 %v796, 0.0
    %v803 = vmax.f32 %v798, 0.0
    %v804 = vpack.c.bf16 %v802, %v802
    %v805 = vpack.c.bf16 %v803, %v803
    %v806 = vld [vmem:[#allocation17] sm:$0xf]
    %v807 = vld [vmem:[#allocation17 + $0x4] sm:$0xf]
    %v808 = vld [vmem:[#allocation17 + $0x8] sm:$0xf]
    %v809 = vld [vmem:[#allocation17 + $0xc] sm:$0xf]
    %v810 = vld [vmem:[#allocation17 + $0x10] sm:$0xf]
    %v811 = vld [vmem:[#allocation17 + $0x14] sm:$0xf]
    %v812 = vld [vmem:[#allocation17 + $0x18] sm:$0xf]
    %v813 = vld [vmem:[#allocation17 + $0x1c] sm:$0xf]
    %v814 = vld [vmem:[#allocation17 + $0x20] sm:$0xf]
    %v815 = vld [vmem:[#allocation17 + $0x24] sm:$0xf]
    %v816 = vld [vmem:[#allocation17 + $0x28] sm:$0xf]
    %v817 = vld [vmem:[#allocation17 + $0x2c] sm:$0xf]
    %v818 = vld [vmem:[#allocation17 + $0x30] sm:$0xf]
    %v819 = vld [vmem:[#allocation17 + $0x34] sm:$0xf]
    %v820 = vld [vmem:[#allocation17 + $0x38] sm:$0xf]
    %v821 = vld [vmem:[#allocation17 + $0x3c] sm:$0xf]
    %v822 = vld [vmem:[#allocation17 + $0x40] sm:$0xf]
    %v823 = vld [vmem:[#allocation17 + $0x44] sm:$0xf]
    %v824 = vld [vmem:[#allocation17 + $0x48] sm:$0xf]
    %v825 = vld [vmem:[#allocation17 + $0x4c] sm:$0xf]
    %v826 = vld [vmem:[#allocation17 + $0x50] sm:$0xf]
    %v827 = vld [vmem:[#allocation17 + $0x54] sm:$0xf]
    %v828 = vld [vmem:[#allocation17 + $0x58] sm:$0xf]
    %v829 = vld [vmem:[#allocation17 + $0x5c] sm:$0xf]
    %v830 = vld [vmem:[#allocation19] sm:$0x1]
    %v832 = vlaneseq
    %v833 = vshrl.u32 %v832, 7
    %v834 = vsub.s32 0, %v833
    %v835 = vrot.slane %v830, %v834
    %v861 = vunpack.c.l.b16 %v806
    %v862 = vunpack.c.l.b16 %v807
    %v863 = vunpack.c.l.b16 %v808
    %v864 = vunpack.c.l.b16 %v809
    %v865 = vunpack.c.l.b16 %v810
    %v866 = vunpack.c.l.b16 %v811
    %v867 = vunpack.c.l.b16 %v812
    %v868 = vunpack.c.l.b16 %v813
    %v869 = vunpack.c.l.b16 %v814
    %v870 = vunpack.c.l.b16 %v815
    %v871 = vunpack.c.l.b16 %v816
    %v872 = vunpack.c.l.b16 %v817
    %v873 = vunpack.c.l.b16 %v818
    %v874 = vunpack.c.l.b16 %v819
    %v875 = vunpack.c.l.b16 %v820
    %v876 = vunpack.c.l.b16 %v821
    %v877 = vunpack.c.l.b16 %v822
    %v878 = vunpack.c.l.b16 %v823
    %v879 = vunpack.c.l.b16 %v824
    %v880 = vunpack.c.l.b16 %v825
    %v881 = vunpack.c.l.b16 %v826
    %v882 = vunpack.c.l.b16 %v827
    %v883 = vunpack.c.l.b16 %v828
    %v884 = vunpack.c.l.b16 %v829
    %v885 = vpack.c.b16 %v862, %v861
    %v886 = vpack.c.b16 %v864, %v863
    %v887 = vpack.c.b16 %v866, %v865
    %v888 = vpack.c.b16 %v868, %v867
    %v889 = vpack.c.b16 %v870, %v869
    %v890 = vpack.c.b16 %v872, %v871
    %v891 = vpack.c.b16 %v874, %v873
    %v892 = vpack.c.b16 %v876, %v875
    %v893 = vpack.c.b16 %v878, %v877
    %v894 = vpack.c.b16 %v880, %v879
    %v895 = vpack.c.b16 %v882, %v881
    %v896 = vpack.c.b16 %v884, %v883
    %v910 = vsel %vm466, %v805, 0
    %912 = vmatprep.subr.bf16.mxu0 0
    %913 = vmatpush1.bf16.msra.mxu0 %v892
    %914 = vmatprep.subr.bf16.mxu0 0
    %915 = vmatpush1.bf16.msra.mxu0 %v891
    %916 = vmatprep.subr.bf16.mxu0 0
    %917 = vmatpush1.bf16.msra.mxu0 %v890
    %918 = vmatprep.subr.bf16.mxu0 0
    %919 = vmatpush1.bf16.msra.mxu0 %v889
    %920 = vmatprep.subr.bf16.mxu0 0
    %921 = vmatpush1.bf16.msra.mxu0 %v888
    %922 = vmatprep.subr.bf16.mxu0 0
    %923 = vmatpush1.bf16.msra.mxu0 %v887
    %924 = vmatprep.subr.bf16.mxu0 0
    %925 = vmatpush1.bf16.msra.mxu0 %v886
    %926 = vmatprep.subr.bf16.mxu0 0
    %927 = vmatpush1.bf16.msra.mxu0 %v885
    %928 = vmatprep.subr.bf16.mxu0 0
    %929 = vmatpush2.bf16.msra.mxu0 0
    %930 = vmatprep.subr.bf16.mxu0 0
    %931 = vmatpush2.bf16.msra.mxu0 0
    %932 = vmatprep.subr.bf16.mxu0 0
    %933 = vmatpush2.bf16.msra.mxu0 0
    %934 = vmatprep.subr.bf16.mxu0 0
    %935 = vmatpush2.bf16.msra.mxu0 0
    %936 = vmatprep.subr.bf16.mxu0 0
    %937 = vmatpush2.bf16.msra.mxu0 %v896
    %938 = vmatprep.subr.bf16.mxu0 0
    %939 = vmatpush2.bf16.msra.mxu0 %v895
    %940 = vmatprep.subr.bf16.mxu0 0
    %941 = vmatpush2.bf16.msra.mxu0 %v894
    %942 = vmatprep.subr.bf16.mxu0 0
    %943 = vmatpush2.bf16.msra.mxu0 %v893
    %944 = vmatprep.mubr.bf16.mxu0 %v910
    %945 = vmatmul.mubr.bf16.gmra.mxu0 %v804
    %v946 = vpop.f32.mrf.mxu0
    %v947 = vadd.f32 %v835, %v946
    %v948 = vpop.f32.mrf.mxu0
    %v949 = vpop.f32.mrf.mxu0
    %v950 = vpop.f32.mrf.mxu0
    %951 = vdwg.mxu0
    %vm952 = vcmask 550400
    %v953 = vsel %vm952, %v594, -inf
    %954 = vmax.xlane.f32.xlu0 %v953
    %v955 = vpop.xlane.xlu0 %954
    %v956 = vsub.f32 %v594, %v955
    %v957 = vmul.f32 %v956, 1.442695
    %v958 = vpow.pop %v957
    %960 = vrot.lane.b32.xlu0 %v958, 64
    %v961 = vpop.permute.xlu0 %960
    %vm963 = vcmask 25600
    %v964 = vsel %vm963, %v961, 0.0
    %965 = vadd.xlane.f32.xlu0 %v964
    %v966 = vpop.xlane.xlu0 %965
    %v967 = vrcp.pop %v966
    %v968 = vmul.f32 %v958, %v967
    %vm969 = vcmask 583200
    %v970 = vsel %vm969, %v594, -inf
    %971 = vmax.xlane.f32.xlu0 %v970
    %v972 = vpop.xlane.xlu0 %971
    %v973 = vsub.f32 %v594, %v972
    %v974 = vmul.f32 %v973, 1.442695
    %v975 = vpow.pop %v974
    %977 = vrot.lane.b32.xlu0 %v975, 60
    %v978 = vpop.permute.xlu0 %977
    %v980 = vsel %vm963, %v978, 0.0
    %981 = vadd.xlane.f32.xlu0 %v980
    %v982 = vpop.xlane.xlu0 %981
    %v983 = vrcp.pop %v982
    %v984 = vmul.f32 %v975, %v983
    %986 = vrot.lane.b32.xlu0 %v968, 64
    %v987 = vpop.permute.xlu0 %986
    %990 = vrot.lane.b32.xlu0 %v984, 64
    %v991 = vpop.permute.xlu0 %990
    %vm993 = vcmask 31744
    %v994 = vsel %vm993, %v987, %v991
    %v995 = vpack.c.bf16 %v994, %v994
    %v996 = vld [vmem:[#allocation20] sm:$0xf]
    %vm997 = vcmask 64512
    %v999 = vsel %vm997, %v995, 0
    %vm1001 = vcmask 1043456
    %v1003 = vsel %vm1001, %v996, 0
    %1005 = vmatprep.subr.bf16.mxu0 0
    %1006 = vmatpush1.bf16.msra.mxu0 0
    %1007 = vmatprep.subr.bf16.mxu0 0
    %1008 = vmatpush1.bf16.msra.mxu0 0
    %1009 = vmatprep.subr.bf16.mxu0 0
    %1010 = vmatpush1.bf16.msra.mxu0 0
    %1011 = vmatprep.subr.bf16.mxu0 0
    %1012 = vmatpush1.bf16.msra.mxu0 0
    %1013 = vmatprep.subr.bf16.mxu0 0
    %1014 = vmatpush1.bf16.msra.mxu0 0
    %1015 = vmatprep.subr.bf16.mxu0 0
    %1016 = vmatpush1.bf16.msra.mxu0 0
    %1017 = vmatprep.subr.bf16.mxu0 0
    %1018 = vmatpush1.bf16.msra.mxu0 0
    %1019 = vmatprep.subr.bf16.mxu0 0
    %1020 = vmatpush1.bf16.msra.mxu0 %v1003
    %1021 = vmatprep.subr.bf16.mxu0 0
    %1022 = vmatpush2.bf16.msra.mxu0 0
    %1023 = vmatprep.subr.bf16.mxu0 0
    %1024 = vmatpush2.bf16.msra.mxu0 0
    %1025 = vmatprep.subr.bf16.mxu0 0
    %1026 = vmatpush2.bf16.msra.mxu0 0
    %1027 = vmatprep.subr.bf16.mxu0 0
    %1028 = vmatpush2.bf16.msra.mxu0 0
    %1029 = vmatprep.subr.bf16.mxu0 0
    %1030 = vmatpush2.bf16.msra.mxu0 0
    %1031 = vmatprep.subr.bf16.mxu0 0
    %1032 = vmatpush2.bf16.msra.mxu0 0
    %1033 = vmatprep.subr.bf16.mxu0 0
    %1034 = vmatpush2.bf16.msra.mxu0 0
    %1035 = vmatprep.subr.bf16.mxu0 0
    %1036 = vmatpush2.bf16.msra.mxu0 0
    %1037 = vmatprep.mubr.bf16.mxu0 0
    %1038 = vmatmul.mubr.bf16.gmra.mxu0 %v999
    %v1039 = vpop.f32.mrf.mxu0
    %v1040 = vadd.f32 0.0, %v1039
    %v1041 = vpop.f32.mrf.mxu0
    %v1042 = vpop.f32.mrf.mxu0
    %v1043 = vpop.f32.mrf.mxu0
    %1044 = vdwg.mxu0
    %v1045 = vmul.f32 %v947, %v1040
    %v1046 = vpack.c.bf16 %v1045, %v1045
    %v1047 = vld [vmem:[%s17] sm:$0xf]
    %v1048 = vld [vmem:[%s17 + $0x4] sm:$0xf]
    %v1049 = vld [vmem:[%s17 + $0x8] sm:$0xf]
    %v1050 = vld [vmem:[%s17 + $0xc] sm:$0xf]
    %v1051 = vld [vmem:[%s17 + $0x10] sm:$0xf]
    %v1052 = vld [vmem:[%s17 + $0x14] sm:$0xf]
    %v1053 = vld [vmem:[%s17 + $0x18] sm:$0xf]
    %v1054 = vld [vmem:[%s17 + $0x1c] sm:$0xf]
    %v1055 = vld [vmem:[%s17 + $0x20] sm:$0xf]
    %v1056 = vld [vmem:[%s17 + $0x24] sm:$0xf]
    %v1057 = vld [vmem:[%s17 + $0x28] sm:$0xf]
    %v1058 = vld [vmem:[%s17 + $0x2c] sm:$0xf]
    %v1059 = vld [vmem:[%s17 + $0x30] sm:$0xf]
    %v1060 = vld [vmem:[%s17 + $0x34] sm:$0xf]
    %v1061 = vld [vmem:[%s17 + $0x38] sm:$0xf]
    %v1062 = vld [vmem:[%s17 + $0x3c] sm:$0xf]
    %v1063 = vld [vmem:[#allocation22] sm:$0x1]
    %v1065 = vlaneseq
    %v1066 = vshrl.u32 %v1065, 7
    %v1067 = vsub.s32 0, %v1066
    %v1068 = vrot.slane %v1063, %v1067
    %v1086 = vunpack.c.l.b16 %v1047
    %v1087 = vunpack.c.l.b16 %v1048
    %v1088 = vunpack.c.l.b16 %v1049
    %v1089 = vunpack.c.l.b16 %v1050
    %v1090 = vunpack.c.l.b16 %v1051
    %v1091 = vunpack.c.l.b16 %v1052
    %v1092 = vunpack.c.l.b16 %v1053
    %v1093 = vunpack.c.l.b16 %v1054
    %v1094 = vunpack.c.l.b16 %v1055
    %v1095 = vunpack.c.l.b16 %v1056
    %v1096 = vunpack.c.l.b16 %v1057
    %v1097 = vunpack.c.l.b16 %v1058
    %v1098 = vunpack.c.l.b16 %v1059
    %v1099 = vunpack.c.l.b16 %v1060
    %v1100 = vunpack.c.l.b16 %v1061
    %v1101 = vunpack.c.l.b16 %v1062
    %v1102 = vpack.c.b16 %v1087, %v1086
    %v1103 = vpack.c.b16 %v1089, %v1088
    %v1104 = vpack.c.b16 %v1091, %v1090
    %v1105 = vpack.c.b16 %v1093, %v1092
    %v1106 = vpack.c.b16 %v1095, %v1094
    %v1107 = vpack.c.b16 %v1097, %v1096
    %v1108 = vpack.c.b16 %v1099, %v1098
    %v1109 = vpack.c.b16 %v1101, %v1100
    %1118 = vmatprep.subr.bf16.mxu0 0
    %1119 = vmatpush1.bf16.msra.mxu0 %v1109
    %1120 = vmatprep.subr.bf16.mxu0 0
    %1121 = vmatpush1.bf16.msra.mxu0 %v1108
    %1122 = vmatprep.subr.bf16.mxu0 0
    %1123 = vmatpush1.bf16.msra.mxu0 %v1107
    %1124 = vmatprep.subr.bf16.mxu0 0
    %1125 = vmatpush1.bf16.msra.mxu0 %v1106
    %1126 = vmatprep.subr.bf16.mxu0 0
    %1127 = vmatpush1.bf16.msra.mxu0 %v1105
    %1128 = vmatprep.subr.bf16.mxu0 0
    %1129 = vmatpush1.bf16.msra.mxu0 %v1104
    %1130 = vmatprep.subr.bf16.mxu0 0
    %1131 = vmatpush1.bf16.msra.mxu0 %v1103
    %1132 = vmatprep.subr.bf16.mxu0 0
    %1133 = vmatpush1.bf16.msra.mxu0 %v1102
    %1134 = vmatprep.subr.bf16.mxu0 0
    %1135 = vmatpush2.bf16.msra.mxu0 0
    %1136 = vmatprep.subr.bf16.mxu0 0
    %1137 = vmatpush2.bf16.msra.mxu0 0
    %1138 = vmatprep.subr.bf16.mxu0 0
    %1139 = vmatpush2.bf16.msra.mxu0 0
    %1140 = vmatprep.subr.bf16.mxu0 0
    %1141 = vmatpush2.bf16.msra.mxu0 0
    %1142 = vmatprep.subr.bf16.mxu0 0
    %1143 = vmatpush2.bf16.msra.mxu0 0
    %1144 = vmatprep.subr.bf16.mxu0 0
    %1145 = vmatpush2.bf16.msra.mxu0 0
    %1146 = vmatprep.subr.bf16.mxu0 0
    %1147 = vmatpush2.bf16.msra.mxu0 0
    %1148 = vmatprep.subr.bf16.mxu0 0
    %1149 = vmatpush2.bf16.msra.mxu0 0
    %1150 = vmatprep.mubr.bf16.mxu0 0
    %1151 = vmatmul.mubr.bf16.gmra.mxu0 %v1046
    %v1152 = vpop.f32.mrf.mxu0
    %v1153 = vadd.f32 %v1068, %v1152
    %v1154 = vpop.f32.mrf.mxu0
    %v1155 = vpop.f32.mrf.mxu0
    %v1156 = vpop.f32.mrf.mxu0
    %1157 = vdwg.mxu0
    %v1158 = vmax.f32 %v1153, 0.0
    %v1159 = vpack.c.bf16 %v1158, %v1158
    %v1160 = vld [vmem:[#allocation23] sm:$0xf]
    %v1161 = vld [vmem:[#allocation23 + $0x4] sm:$0xf]
    %v1162 = vld [vmem:[#allocation23 + $0x8] sm:$0xf]
    %v1163 = vld [vmem:[#allocation23 + $0xc] sm:$0xf]
    %v1164 = vld [vmem:[#allocation23 + $0x10] sm:$0xf]
    %v1165 = vld [vmem:[#allocation23 + $0x14] sm:$0xf]
    %v1166 = vld [vmem:[#allocation23 + $0x18] sm:$0xf]
    %v1167 = vld [vmem:[#allocation23 + $0x1c] sm:$0xf]
    %v1168 = vld [vmem:[#allocation25] sm:$0x1]
    %v1170 = vlaneseq
    %v1171 = vshrl.u32 %v1170, 7
    %v1172 = vsub.s32 0, %v1171
    %v1173 = vrot.slane %v1168, %v1172
    %v1183 = vunpack.c.l.b16 %v1160
    %v1184 = vunpack.c.l.b16 %v1161
    %v1185 = vunpack.c.l.b16 %v1162
    %v1186 = vunpack.c.l.b16 %v1163
    %v1187 = vunpack.c.l.b16 %v1164
    %v1188 = vunpack.c.l.b16 %v1165
    %v1189 = vunpack.c.l.b16 %v1166
    %v1190 = vunpack.c.l.b16 %v1167
    %v1191 = vpack.c.b16 %v1184, %v1183
    %v1192 = vpack.c.b16 %v1186, %v1185
    %v1193 = vpack.c.b16 %v1188, %v1187
    %v1194 = vpack.c.b16 %v1190, %v1189
    %v1200 = vsel %vm466, %v1159, 0
    %1202 = vmatprep.subr.bf16.mxu0 0
    %1203 = vmatpush1.bf16.msra.mxu0 0
    %1204 = vmatprep.subr.bf16.mxu0 0
    %1205 = vmatpush1.bf16.msra.mxu0 0
    %1206 = vmatprep.subr.bf16.mxu0 0
    %1207 = vmatpush1.bf16.msra.mxu0 0
    %1208 = vmatprep.subr.bf16.mxu0 0
    %1209 = vmatpush1.bf16.msra.mxu0 0
    %1210 = vmatprep.subr.bf16.mxu0 0
    %1211 = vmatpush1.bf16.msra.mxu0 %v1194
    %1212 = vmatprep.subr.bf16.mxu0 0
    %1213 = vmatpush1.bf16.msra.mxu0 %v1193
    %1214 = vmatprep.subr.bf16.mxu0 0
    %1215 = vmatpush1.bf16.msra.mxu0 %v1192
    %1216 = vmatprep.subr.bf16.mxu0 0
    %1217 = vmatpush1.bf16.msra.mxu0 %v1191
    %1218 = vmatprep.subr.bf16.mxu0 0
    %1219 = vmatpush2.bf16.msra.mxu0 0
    %1220 = vmatprep.subr.bf16.mxu0 0
    %1221 = vmatpush2.bf16.msra.mxu0 0
    %1222 = vmatprep.subr.bf16.mxu0 0
    %1223 = vmatpush2.bf16.msra.mxu0 0
    %1224 = vmatprep.subr.bf16.mxu0 0
    %1225 = vmatpush2.bf16.msra.mxu0 0
    %1226 = vmatprep.subr.bf16.mxu0 0
    %1227 = vmatpush2.bf16.msra.mxu0 0
    %1228 = vmatprep.subr.bf16.mxu0 0
    %1229 = vmatpush2.bf16.msra.mxu0 0
    %1230 = vmatprep.subr.bf16.mxu0 0
    %1231 = vmatpush2.bf16.msra.mxu0 0
    %1232 = vmatprep.subr.bf16.mxu0 0
    %1233 = vmatpush2.bf16.msra.mxu0 0
    %1234 = vmatprep.mubr.bf16.mxu0 0
    %1235 = vmatmul.mubr.bf16.gmra.mxu0 %v1200
    %v1236 = vpop.f32.mrf.mxu0
    %v1237 = vadd.f32 %v1173, %v1236
    %v1238 = vpop.f32.mrf.mxu0
    %v1239 = vpop.f32.mrf.mxu0
    %v1240 = vpop.f32.mrf.mxu0
    %1241 = vdwg.mxu0
    %v1242 = vmax.f32 %v1237, 0.0
    %v1243 = vpack.c.bf16 %v1242, %v1242
    %v1244 = vld [vmem:[#allocation26] sm:$0xf]
    %v1245 = vld [vmem:[#allocation26 + $0x4] sm:$0xf]
    %v1246 = vld [vmem:[#allocation26 + $0x8] sm:$0xf]
    %v1247 = vld [vmem:[#allocation26 + $0xc] sm:$0xf]
    %v1248 = vld [vmem:[#allocation26 + $0x10] sm:$0xf]
    %v1249 = vld [vmem:[#allocation26 + $0x14] sm:$0xf]
    %v1250 = vld [vmem:[#allocation26 + $0x18] sm:$0xf]
    %v1251 = vld [vmem:[#allocation26 + $0x1c] sm:$0xf]
    %v1252 = vld [vmem:[#allocation28] sm:$0x1]
    %v1254 = vlaneseq
    %v1255 = vshrl.u32 %v1254, 7
    %v1256 = vsub.s32 0, %v1255
    %v1257 = vrot.slane %v1252, %v1256
    %v1267 = vunpack.c.l.b16 %v1244
    %v1268 = vunpack.c.l.b16 %v1245
    %v1269 = vunpack.c.l.b16 %v1246
    %v1270 = vunpack.c.l.b16 %v1247
    %v1271 = vunpack.c.l.b16 %v1248
    %v1272 = vunpack.c.l.b16 %v1249
    %v1273 = vunpack.c.l.b16 %v1250
    %v1274 = vunpack.c.l.b16 %v1251
    %v1275 = vpack.c.b16 %v1268, %v1267
    %v1276 = vpack.c.b16 %v1270, %v1269
    %v1277 = vpack.c.b16 %v1272, %v1271
    %v1278 = vpack.c.b16 %v1274, %v1273
    %v1284 = vsel %vm466, %v1243, 0
    %1286 = vmatprep.subr.bf16.mxu0 0
    %1287 = vmatpush1.bf16.msra.mxu0 0
    %1288 = vmatprep.subr.bf16.mxu0 0
    %1289 = vmatpush1.bf16.msra.mxu0 0
    %1290 = vmatprep.subr.bf16.mxu0 0
    %1291 = vmatpush1.bf16.msra.mxu0 0
    %1292 = vmatprep.subr.bf16.mxu0 0
    %1293 = vmatpush1.bf16.msra.mxu0 0
    %1294 = vmatprep.subr.bf16.mxu0 0
    %1295 = vmatpush1.bf16.msra.mxu0 %v1278
    %1296 = vmatprep.subr.bf16.mxu0 0
    %1297 = vmatpush1.bf16.msra.mxu0 %v1277
    %1298 = vmatprep.subr.bf16.mxu0 0
    %1299 = vmatpush1.bf16.msra.mxu0 %v1276
    %1300 = vmatprep.subr.bf16.mxu0 0
    %1301 = vmatpush1.bf16.msra.mxu0 %v1275
    %1302 = vmatprep.subr.bf16.mxu0 0
    %1303 = vmatpush2.bf16.msra.mxu0 0
    %1304 = vmatprep.subr.bf16.mxu0 0
    %1305 = vmatpush2.bf16.msra.mxu0 0
    %1306 = vmatprep.subr.bf16.mxu0 0
    %1307 = vmatpush2.bf16.msra.mxu0 0
    %1308 = vmatprep.subr.bf16.mxu0 0
    %1309 = vmatpush2.bf16.msra.mxu0 0
    %1310 = vmatprep.subr.bf16.mxu0 0
    %1311 = vmatpush2.bf16.msra.mxu0 0
    %1312 = vmatprep.subr.bf16.mxu0 0
    %1313 = vmatpush2.bf16.msra.mxu0 0
    %1314 = vmatprep.subr.bf16.mxu0 0
    %1315 = vmatpush2.bf16.msra.mxu0 0
    %1316 = vmatprep.subr.bf16.mxu0 0
    %1317 = vmatpush2.bf16.msra.mxu0 0
    %1318 = vmatprep.mubr.bf16.mxu0 0
    %1319 = vmatmul.mubr.bf16.gmra.mxu0 %v1284
    %v1320 = vpop.f32.mrf.mxu0
    %v1321 = vadd.f32 %v1257, %v1320
    %v1322 = vpop.f32.mrf.mxu0
    %v1323 = vpop.f32.mrf.mxu0
    %v1324 = vpop.f32.mrf.mxu0
    %1325 = vdwg.mxu0
    %1326 = vst [vmem:[#allocation29] sm:$0x3] %v1321
    // Predicated region
    $region162: #{fwd.1} parent=1 // pred_check
      _
    $region163: #{fwd.1} parent=1 // pred_check_branch
      %1328 = sbr.rel (0) target = $region165
    $region164: #{fwd.1} parent=1 // pred_region
      %s1330 = ssub.s32 32, 32
      %1331 = vsyncadd [#allocation4], %s1330
      %s1333 = sshll.u32 [#allocation29], 4
      %s1334 = int_to_ptr.vmem [resolvable:$true] %s1333
      %1336 = dma.vmem_to_hbm [thread:$0]  %s1334, 32, %s23, [#allocation4]
    $region165: #{fwd.1} parent=1 // pred_fallthru
      _
    // Predicated region
    $region166: #{fwd.1} parent=1 // pred_check
      _
    $region167: #{fwd.1} parent=1 // pred_check_branch
      %1338 = sbr.rel (0) target = $region169
    $region168: #{fwd.1} parent=1 // pred_region
      %1339 = dma.done [#allocation4], 32
    $region169: #{fwd.1} parent=1 // pred_fallthru
      _
    %1340 = vsyncpa [#allocation3], 1
    %1341 = vsyncpa [#allocation6], 1
    %1342 = vsyncpa [#allocation9], 1
    %1343 = vsyncpa [#allocation12], 1
    %1344 = vsyncpa [#allocation15], 1
    %1345 = vsyncpa [#allocation18], 1
    %1346 = vsyncpa [#allocation21], 1
    %1347 = vsyncpa [#allocation24], 1
    %1348 = vsyncpa [#allocation27], 1
    %1349 = vsyncpa [#allocation4], 1

</llo_original>
